<compile_context>
chip_gen: v7x
topology: tpu7x:2x2x1
jax: 0.10.0
libtpu: 0.0.40
codegen_flags: <defaults>
</compile_context>

<pallas_src>
import functools

import jax
import jax.numpy as jnp
from jax import lax
from jax.experimental import pallas as pl
from jax.experimental.pallas import tpu as pltpu


def _block_kernel(x_ref, w1_ref, b1_ref, w2_ref, b2_ref, m_ref, o_ref, *, width):
    """One batch element per grid step.  Everything is (rows=channels,
    lanes=flattened H*W).

    x_ref  : (1, Cin, HW)    f32   raw input (reshape of NCHW)
    w1_ref : (9, Cmid, Cin)  f32   conv1 weights, tap-major
    b1_ref : (Cmid, 1)       f32
    w2_ref : (9, Cout, Cmid) bf16  conv2 weights, tap-major
    b2_ref : (Cout, 1)       f32
    m_ref  : (2, HW)         bf16  row 0: (col > 0), row 1: (col < W-1)
    o_ref  : (1, Cout, HW)   f32   lane-dense output (== flattened NCHW)
    """
    hw = x_ref.shape[2]

    masks_bf = m_ref[...]                              # (2, HW) bf16, exact 0/1
    not_left_bf, not_right_bf = masks_bf[0:1, :], masks_bf[1:2, :]
    not_left_f32 = not_left_bf.astype(jnp.float32)
    not_right_f32 = not_right_bf.astype(jnp.float32)

    def shift_lanes(v, d):
        # out[:, p] = v[:, p + d], zero-filled where p + d falls outside [0, hw).
        # TODO(synk): at production tile sizes (lane width a multiple of 128)
        # switch to pltpu.roll (rides the otherwise-idle XLU slot) plus fused
        # row/col masks, so the shift does not go through the scarce vst slot.
        if d == 0:
            return v
        z = jnp.zeros((v.shape[0], abs(d)), v.dtype)
        if d > 0:
            return jnp.concatenate([v[:, d:], z], axis=1)
        return jnp.concatenate([z, v[:, :hw + d]], axis=1)

    def conv3x3(src, w_ref, not_left, not_right):
        # 9 accumulating tap GEMMs: acc += w[ky,kx] @ shift(src, dy*W + dx).
        acc = None
        for ky in range(3):
            for kx in range(3):
                t = shift_lanes(src, (ky - 1) * width + (kx - 1))
                if kx == 0:        # dx = -1: kill taps that wrapped a row edge
                    t = t * not_left
                elif kx == 2:      # dx = +1
                    t = t * not_right
                p = jnp.dot(w_ref[ky * 3 + kx], t,
                            preferred_element_type=jnp.float32)
                acc = p if acc is None else acc + p
        return acc

    # conv1 (f32 operands, f32 acc) + bias + ReLU; cast once to bf16 for conv2.
    mid = conv3x3(x_ref[0], w1_ref, not_left_f32, not_right_f32)      # (Cmid, HW)
    mid = jnp.maximum(mid + b1_ref[...], 0.0).astype(jnp.bfloat16)

    # conv2 (bf16 operands, f32 acc) + bias, dense lane-width store.
    out = conv3x3(mid, w2_ref, not_left_bf, not_right_bf)             # (Cout, HW)
    o_ref[0] = (out + b2_ref[...]).astype(o_ref.dtype)


@jax.jit
def block_forward(x_nchw, w1, b1, w2, b2):
    """Block.forward.  x_nchw: (N, Cin, H, W) f32; weights in PyTorch OIHW."""
    N, Cin, H, W = x_nchw.shape
    Cmid = w1.shape[0]
    Cout = w2.shape[0]
    HW = H * W

    # Raw input, channel-major with the flattened spatial axis on lanes.
    x_flat = x_nchw.reshape(N, Cin, HW).astype(jnp.float32)

    # Tap-major weights so each tap GEMM slices one (Cout_blk, Cin_blk) matrix.
    w1_t = jnp.transpose(w1, (2, 3, 0, 1)).reshape(9, Cmid, Cin).astype(jnp.float32)
    w2_t = jnp.transpose(w2, (2, 3, 0, 1)).reshape(9, Cout, Cmid).astype(jnp.bfloat16)
    b1_c = b1.reshape(Cmid, 1).astype(jnp.float32)
    b2_c = b2.reshape(Cout, 1).astype(jnp.float32)

    # Row-edge masks over the flattened spatial (lane) axis; 0/1 exact in bf16.
    col = jnp.arange(HW, dtype=jnp.int32) % W
    edge_m = jnp.stack([col > 0, col < W - 1]).astype(jnp.bfloat16)    # (2, HW)

    out = pl.pallas_call(
        functools.partial(_block_kernel, width=W),
        out_shape=jax.ShapeDtypeStruct((N, Cout, HW), jnp.float32),
        grid=(N,),
        in_specs=[
            pl.BlockSpec((1, Cin, HW), lambda n: (n, 0, 0)),
            pl.BlockSpec((9, Cmid, Cin), lambda n: (0, 0, 0)),
            pl.BlockSpec((Cmid, 1), lambda n: (0, 0)),
            pl.BlockSpec((9, Cout, Cmid), lambda n: (0, 0, 0)),
            pl.BlockSpec((Cout, 1), lambda n: (0, 0)),
            pl.BlockSpec((2, HW), lambda n: (0, 0)),
        ],
        out_specs=pl.BlockSpec((1, Cout, HW), lambda n: (n, 0, 0)),
        compiler_params=pltpu.CompilerParams(
            dimension_semantics=("parallel",)),
        # TODO(synk): for realistic UNet shapes, add a second "parallel" grid
        # axis that tiles H into TH-row blocks (TH*W a multiple of 128) with a
        # 2-row input halo (two fused 3x3 convs), size the tile for ~48 MiB
        # resident on v7x (~100 MiB on v5e/v6e), and set vmem_limit_bytes
        # accordingly.
    )(x_flat, w1_t, b1_c, w2_t, b2_c, edge_m)

    # (N, Cout, H*W) is already channel-major -> just unflatten to NCHW.
    return out.reshape(N, Cout, H, W)


def _reference(x, w1, b1, w2, b2):
    """Pure-JAX f32 reference (lax conv, NCHW/OIHW == PyTorch semantics)."""
    dn = ("NCHW", "OIHW", "NCHW")
    y = lax.conv_general_dilated(x, w1, (1, 1), ((1, 1), (1, 1)),
                                 dimension_numbers=dn) + b1.reshape(1, -1, 1, 1)
    y = jnp.maximum(y, 0.0)
    z = lax.conv_general_dilated(y, w2, (1, 1), ((1, 1), (1, 1)),
                                 dimension_numbers=dn) + b2.reshape(1, -1, 1, 1)
    return z


if __name__ == "__main__":
    # Block(in_ch=4, out_ch=8) on a small input.
    N, Cin, Cout, H, W = 2, 4, 8, 16, 16

    key = jax.random.PRNGKey(0)
    kx, kw1, kb1, kw2, kb2 = jax.random.split(key, 5)

    x = jax.random.normal(kx, (N, Cin, H, W), dtype=jnp.float32)
    # PyTorch OIHW parameter layout: (out_ch, in_ch, 3, 3).
    w1 = 0.1 * jax.random.normal(kw1, (Cout, Cin, 3, 3), dtype=jnp.float32)
    b1 = 0.1 * jax.random.normal(kb1, (Cout,), dtype=jnp.float32)
    w2 = 0.1 * jax.random.normal(kw2, (Cout, Cout, 3, 3), dtype=jnp.float32)
    b2 = 0.1 * jax.random.normal(kb2, (Cout,), dtype=jnp.float32)

    out = jax.block_until_ready(block_forward(x, w1, b1, w2, b2))
    ref = jax.block_until_ready(_reference(x, w1, b1, w2, b2))

    assert out.shape == (N, Cout, H, W)
    err = jnp.max(jnp.abs(out - ref))
    # conv2 uses bf16 MXU operands (f32 accumulation) -> loosened tolerance.
    assert jnp.allclose(out, ref, atol=3e-2, rtol=3e-2), f"max abs err {err}"

    print("KERNEL_OK")
</pallas_src>

<mosaic_0001>
module attributes {stable_mosaic.version = 11 : i64} {
  func.func @_block_kernel(%arg0: i32, %arg1: memref<1x4x256xf32, #tpu.memory_space<vmem>>, %arg2: memref<9x8x4xf32, #tpu.memory_space<vmem>>, %arg3: memref<8x1xf32, #tpu.memory_space<vmem>>, %arg4: memref<9x8x8xbf16, #tpu.memory_space<vmem>>, %arg5: memref<8x1xf32, #tpu.memory_space<vmem>>, %arg6: memref<2x256xbf16, #tpu.memory_space<vmem>>, %arg7: memref<1x8x256xf32, #tpu.memory_space<vmem>>) attributes {dimension_semantics = [#tpu.dimension_semantics<parallel>], iteration_bounds = array<i64: 2>, scalar_prefetch = 0 : i64, scratch_operands = 0 : i64, tpu.core_type = #tpu.core_type<tc>, window_params = [{transform_indices = @transform_0, window_bounds = array<i64: 1, 4, 256>}, {pipeline_mode = #tpu.pipeline_mode<synchronous>, transform_indices = @transform_1, window_bounds = array<i64: 9, 8, 4>}, {pipeline_mode = #tpu.pipeline_mode<synchronous>, transform_indices = @transform_2, window_bounds = array<i64: 8, 1>}, {pipeline_mode = #tpu.pipeline_mode<synchronous>, transform_indices = @transform_3, window_bounds = array<i64: 9, 8, 8>}, {pipeline_mode = #tpu.pipeline_mode<synchronous>, transform_indices = @transform_4, window_bounds = array<i64: 8, 1>}, {pipeline_mode = #tpu.pipeline_mode<synchronous>, transform_indices = @transform_5, window_bounds = array<i64: 2, 256>}, {transform_indices = @transform_6, window_bounds = array<i64: 1, 8, 256>}]} {
    %c0 = arith.constant 0 : index
    %c0_0 = arith.constant 0 : index
    %0 = vector.load %arg6[%c0, %c0_0] : memref<2x256xbf16, #tpu.memory_space<vmem>>, vector<2x256xbf16>
    %1 = vector.extract_strided_slice %0 {offsets = [0, 0], sizes = [1, 256], strides = [1, 1]} : vector<2x256xbf16> to vector<1x256xbf16>
    %2 = vector.extract_strided_slice %0 {offsets = [1, 0], sizes = [1, 256], strides = [1, 1]} : vector<2x256xbf16> to vector<1x256xbf16>
    %3 = arith.extf %1 : vector<1x256xbf16> to vector<1x256xf32>
    %4 = arith.extf %2 : vector<1x256xbf16> to vector<1x256xf32>
    %c0_1 = arith.constant 0 : index
    %c0_2 = arith.constant 0 : index
    %c0_3 = arith.constant 0 : index
    %5 = vector.load %arg1[%c0_1, %c0_2, %c0_3] : memref<1x4x256xf32, #tpu.memory_space<vmem>>, vector<1x4x256xf32>
    %6 = vector.shape_cast %5 : vector<1x4x256xf32> to vector<4x256xf32>
    %cst = arith.constant 0.000000e+00 : f32
    %7 = vector.broadcast %cst : f32 to vector<4x17xf32>
    %8 = vector.extract_strided_slice %6 {offsets = [0, 0], sizes = [4, 239], strides = [1, 1]} : vector<4x256xf32> to vector<4x239xf32>
    %9 = tpu.concatenate %7, %8 in 1 : vector<4x17xf32>, vector<4x239xf32> -> vector<4x256xf32>
    %10 = vector.broadcast %3 : vector<1x256xf32> to vector<4x256xf32>
    %11 = arith.mulf %9, %10 : vector<4x256xf32>
    %c0_4 = arith.constant 0 : index
    %c0_5 = arith.constant 0 : index
    %c0_6 = arith.constant 0 : index
    %12 = vector.load %arg2[%c0_4, %c0_5, %c0_6] : memref<9x8x4xf32, #tpu.memory_space<vmem>>, vector<1x8x4xf32>
    %13 = vector.shape_cast %12 : vector<1x8x4xf32> to vector<8x4xf32>
    %cst_7 = arith.constant dense<0.000000e+00> : vector<8x256xf32>
    %14 = tpu.matmul %13, %11, %cst_7 {dimension_numbers = #tpu.dot_dimension_numbers<[1], [0], [0], [1], [0, 0, 1, 1], [], []>} : vector<8x4xf32>, vector<4x256xf32>, vector<8x256xf32> -> vector<8x256xf32>
    %cst_8 = arith.constant 0.000000e+00 : f32
    %15 = vector.broadcast %cst_8 : f32 to vector<4x16xf32>
    %16 = vector.extract_strided_slice %6 {offsets = [0, 0], sizes = [4, 240], strides = [1, 1]} : vector<4x256xf32> to vector<4x240xf32>
    %17 = tpu.concatenate %15, %16 in 1 : vector<4x16xf32>, vector<4x240xf32> -> vector<4x256xf32>
    %c1 = arith.constant 1 : index
    %c0_9 = arith.constant 0 : index
    %c0_10 = arith.constant 0 : index
    %18 = vector.load %arg2[%c1, %c0_9, %c0_10] : memref<9x8x4xf32, #tpu.memory_space<vmem>>, vector<1x8x4xf32>
    %19 = vector.shape_cast %18 : vector<1x8x4xf32> to vector<8x4xf32>
    %cst_11 = arith.constant dense<0.000000e+00> : vector<8x256xf32>
    %20 = tpu.matmul %19, %17, %cst_11 {dimension_numbers = #tpu.dot_dimension_numbers<[1], [0], [0], [1], [0, 0, 1, 1], [], []>} : vector<8x4xf32>, vector<4x256xf32>, vector<8x256xf32> -> vector<8x256xf32>
    %21 = arith.addf %14, %20 : vector<8x256xf32>
    %cst_12 = arith.constant 0.000000e+00 : f32
    %22 = vector.broadcast %cst_12 : f32 to vector<4x15xf32>
    %23 = vector.extract_strided_slice %6 {offsets = [0, 0], sizes = [4, 241], strides = [1, 1]} : vector<4x256xf32> to vector<4x241xf32>
    %24 = tpu.concatenate %22, %23 in 1 : vector<4x15xf32>, vector<4x241xf32> -> vector<4x256xf32>
    %25 = vector.broadcast %4 : vector<1x256xf32> to vector<4x256xf32>
    %26 = arith.mulf %24, %25 : vector<4x256xf32>
    %c2 = arith.constant 2 : index
    %c0_13 = arith.constant 0 : index
    %c0_14 = arith.constant 0 : index
    %27 = vector.load %arg2[%c2, %c0_13, %c0_14] : memref<9x8x4xf32, #tpu.memory_space<vmem>>, vector<1x8x4xf32>
    %28 = vector.shape_cast %27 : vector<1x8x4xf32> to vector<8x4xf32>
    %cst_15 = arith.constant dense<0.000000e+00> : vector<8x256xf32>
    %29 = tpu.matmul %28, %26, %cst_15 {dimension_numbers = #tpu.dot_dimension_numbers<[1], [0], [0], [1], [0, 0, 1, 1], [], []>} : vector<8x4xf32>, vector<4x256xf32>, vector<8x256xf32> -> vector<8x256xf32>
    %30 = arith.addf %21, %29 : vector<8x256xf32>
    %cst_16 = arith.constant 0.000000e+00 : f32
    %31 = vector.broadcast %cst_16 : f32 to vector<4x1xf32>
    %32 = vector.extract_strided_slice %6 {offsets = [0, 0], sizes = [4, 255], strides = [1, 1]} : vector<4x256xf32> to vector<4x255xf32>
    %33 = tpu.concatenate %31, %32 in 1 : vector<4x1xf32>, vector<4x255xf32> -> vector<4x256xf32>
    %34 = vector.broadcast %3 : vector<1x256xf32> to vector<4x256xf32>
    %35 = arith.mulf %33, %34 : vector<4x256xf32>
    %c3 = arith.constant 3 : index
    %c0_17 = arith.constant 0 : index
    %c0_18 = arith.constant 0 : index
    %36 = vector.load %arg2[%c3, %c0_17, %c0_18] : memref<9x8x4xf32, #tpu.memory_space<vmem>>, vector<1x8x4xf32>
    %37 = vector.shape_cast %36 : vector<1x8x4xf32> to vector<8x4xf32>
    %cst_19 = arith.constant dense<0.000000e+00> : vector<8x256xf32>
    %38 = tpu.matmul %37, %35, %cst_19 {dimension_numbers = #tpu.dot_dimension_numbers<[1], [0], [0], [1], [0, 0, 1, 1], [], []>} : vector<8x4xf32>, vector<4x256xf32>, vector<8x256xf32> -> vector<8x256xf32>
    %39 = arith.addf %30, %38 : vector<8x256xf32>
    %c4 = arith.constant 4 : index
    %c0_20 = arith.constant 0 : index
    %c0_21 = arith.constant 0 : index
    %40 = vector.load %arg2[%c4, %c0_20, %c0_21] : memref<9x8x4xf32, #tpu.memory_space<vmem>>, vector<1x8x4xf32>
    %41 = vector.shape_cast %40 : vector<1x8x4xf32> to vector<8x4xf32>
    %cst_22 = arith.constant dense<0.000000e+00> : vector<8x256xf32>
    %42 = tpu.matmul %41, %6, %cst_22 {dimension_numbers = #tpu.dot_dimension_numbers<[1], [0], [0], [1], [0, 0, 1, 1], [], []>} : vector<8x4xf32>, vector<4x256xf32>, vector<8x256xf32> -> vector<8x256xf32>
    %43 = arith.addf %39, %42 : vector<8x256xf32>
    %cst_23 = arith.constant 0.000000e+00 : f32
    %44 = vector.broadcast %cst_23 : f32 to vector<4x1xf32>
    %45 = vector.extract_strided_slice %6 {offsets = [0, 1], sizes = [4, 255], strides = [1, 1]} : vector<4x256xf32> to vector<4x255xf32>
    %46 = tpu.concatenate %45, %44 in 1 : vector<4x255xf32>, vector<4x1xf32> -> vector<4x256xf32>
    %47 = vector.broadcast %4 : vector<1x256xf32> to vector<4x256xf32>
    %48 = arith.mulf %46, %47 : vector<4x256xf32>
    %c5 = arith.constant 5 : index
    %c0_24 = arith.constant 0 : index
    %c0_25 = arith.constant 0 : index
    %49 = vector.load %arg2[%c5, %c0_24, %c0_25] : memref<9x8x4xf32, #tpu.memory_space<vmem>>, vector<1x8x4xf32>
    %50 = vector.shape_cast %49 : vector<1x8x4xf32> to vector<8x4xf32>
    %cst_26 = arith.constant dense<0.000000e+00> : vector<8x256xf32>
    %51 = tpu.matmul %50, %48, %cst_26 {dimension_numbers = #tpu.dot_dimension_numbers<[1], [0], [0], [1], [0, 0, 1, 1], [], []>} : vector<8x4xf32>, vector<4x256xf32>, vector<8x256xf32> -> vector<8x256xf32>
    %52 = arith.addf %43, %51 : vector<8x256xf32>
    %cst_27 = arith.constant 0.000000e+00 : f32
    %53 = vector.broadcast %cst_27 : f32 to vector<4x15xf32>
    %54 = vector.extract_strided_slice %6 {offsets = [0, 15], sizes = [4, 241], strides = [1, 1]} : vector<4x256xf32> to vector<4x241xf32>
    %55 = tpu.concatenate %54, %53 in 1 : vector<4x241xf32>, vector<4x15xf32> -> vector<4x256xf32>
    %56 = vector.broadcast %3 : vector<1x256xf32> to vector<4x256xf32>
    %57 = arith.mulf %55, %56 : vector<4x256xf32>
    %c6 = arith.constant 6 : index
    %c0_28 = arith.constant 0 : index
    %c0_29 = arith.constant 0 : index
    %58 = vector.load %arg2[%c6, %c0_28, %c0_29] : memref<9x8x4xf32, #tpu.memory_space<vmem>>, vector<1x8x4xf32>
    %59 = vector.shape_cast %58 : vector<1x8x4xf32> to vector<8x4xf32>
    %cst_30 = arith.constant dense<0.000000e+00> : vector<8x256xf32>
    %60 = tpu.matmul %59, %57, %cst_30 {dimension_numbers = #tpu.dot_dimension_numbers<[1], [0], [0], [1], [0, 0, 1, 1], [], []>} : vector<8x4xf32>, vector<4x256xf32>, vector<8x256xf32> -> vector<8x256xf32>
    %61 = arith.addf %52, %60 : vector<8x256xf32>
    %cst_31 = arith.constant 0.000000e+00 : f32
    %62 = vector.broadcast %cst_31 : f32 to vector<4x16xf32>
    %63 = vector.extract_strided_slice %6 {offsets = [0, 16], sizes = [4, 240], strides = [1, 1]} : vector<4x256xf32> to vector<4x240xf32>
    %64 = tpu.concatenate %63, %62 in 1 : vector<4x240xf32>, vector<4x16xf32> -> vector<4x256xf32>
    %c7 = arith.constant 7 : index
    %c0_32 = arith.constant 0 : index
    %c0_33 = arith.constant 0 : index
    %65 = vector.load %arg2[%c7, %c0_32, %c0_33] : memref<9x8x4xf32, #tpu.memory_space<vmem>>, vector<1x8x4xf32>
    %66 = vector.shape_cast %65 : vector<1x8x4xf32> to vector<8x4xf32>
    %cst_34 = arith.constant dense<0.000000e+00> : vector<8x256xf32>
    %67 = tpu.matmul %66, %64, %cst_34 {dimension_numbers = #tpu.dot_dimension_numbers<[1], [0], [0], [1], [0, 0, 1, 1], [], []>} : vector<8x4xf32>, vector<4x256xf32>, vector<8x256xf32> -> vector<8x256xf32>
    %68 = arith.addf %61, %67 : vector<8x256xf32>
    %cst_35 = arith.constant 0.000000e+00 : f32
    %69 = vector.broadcast %cst_35 : f32 to vector<4x17xf32>
    %70 = vector.extract_strided_slice %6 {offsets = [0, 17], sizes = [4, 239], strides = [1, 1]} : vector<4x256xf32> to vector<4x239xf32>
    %71 = tpu.concatenate %70, %69 in 1 : vector<4x239xf32>, vector<4x17xf32> -> vector<4x256xf32>
    %72 = vector.broadcast %4 : vector<1x256xf32> to vector<4x256xf32>
    %73 = arith.mulf %71, %72 : vector<4x256xf32>
    %c8 = arith.constant 8 : index
    %c0_36 = arith.constant 0 : index
    %c0_37 = arith.constant 0 : index
    %74 = vector.load %arg2[%c8, %c0_36, %c0_37] : memref<9x8x4xf32, #tpu.memory_space<vmem>>, vector<1x8x4xf32>
    %75 = vector.shape_cast %74 : vector<1x8x4xf32> to vector<8x4xf32>
    %cst_38 = arith.constant dense<0.000000e+00> : vector<8x256xf32>
    %76 = tpu.matmul %75, %73, %cst_38 {dimension_numbers = #tpu.dot_dimension_numbers<[1], [0], [0], [1], [0, 0, 1, 1], [], []>} : vector<8x4xf32>, vector<4x256xf32>, vector<8x256xf32> -> vector<8x256xf32>
    %77 = arith.addf %68, %76 : vector<8x256xf32>
    %c0_39 = arith.constant 0 : index
    %c0_40 = arith.constant 0 : index
    %78 = vector.load %arg3[%c0_39, %c0_40] : memref<8x1xf32, #tpu.memory_space<vmem>>, vector<8x1xf32>
    %79 = vector.broadcast %78 : vector<8x1xf32> to vector<8x256xf32>
    %80 = arith.addf %77, %79 : vector<8x256xf32>
    %cst_41 = arith.constant 0.000000e+00 : f32
    %81 = vector.broadcast %cst_41 : f32 to vector<8x256xf32>
    %82 = arith.maximumf %80, %81 : vector<8x256xf32>
    %83 = arith.truncf %82 : vector<8x256xf32> to vector<8x256xbf16>
    %cst_42 = arith.constant 0.000000e+00 : bf16
    %84 = vector.broadcast %cst_42 : bf16 to vector<8x17xbf16>
    %85 = vector.extract_strided_slice %83 {offsets = [0, 0], sizes = [8, 239], strides = [1, 1]} : vector<8x256xbf16> to vector<8x239xbf16>
    %86 = tpu.concatenate %84, %85 in 1 : vector<8x17xbf16>, vector<8x239xbf16> -> vector<8x256xbf16>
    %87 = vector.broadcast %1 : vector<1x256xbf16> to vector<8x256xbf16>
    %88 = arith.mulf %86, %87 : vector<8x256xbf16>
    %c0_43 = arith.constant 0 : index
    %c0_44 = arith.constant 0 : index
    %c0_45 = arith.constant 0 : index
    %89 = vector.load %arg4[%c0_43, %c0_44, %c0_45] : memref<9x8x8xbf16, #tpu.memory_space<vmem>>, vector<1x8x8xbf16>
    %90 = vector.shape_cast %89 : vector<1x8x8xbf16> to vector<8x8xbf16>
    %cst_46 = arith.constant dense<0.000000e+00> : vector<8x256xf32>
    %91 = tpu.matmul %90, %88, %cst_46 {dimension_numbers = #tpu.dot_dimension_numbers<[1], [0], [0], [1], [0, 0, 1, 1], [], []>} : vector<8x8xbf16>, vector<8x256xbf16>, vector<8x256xf32> -> vector<8x256xf32>
    %cst_47 = arith.constant 0.000000e+00 : bf16
    %92 = vector.broadcast %cst_47 : bf16 to vector<8x16xbf16>
    %93 = vector.extract_strided_slice %83 {offsets = [0, 0], sizes = [8, 240], strides = [1, 1]} : vector<8x256xbf16> to vector<8x240xbf16>
    %94 = tpu.concatenate %92, %93 in 1 : vector<8x16xbf16>, vector<8x240xbf16> -> vector<8x256xbf16>
    %c1_48 = arith.constant 1 : index
    %c0_49 = arith.constant 0 : index
    %c0_50 = arith.constant 0 : index
    %95 = vector.load %arg4[%c1_48, %c0_49, %c0_50] : memref<9x8x8xbf16, #tpu.memory_space<vmem>>, vector<1x8x8xbf16>
    %96 = vector.shape_cast %95 : vector<1x8x8xbf16> to vector<8x8xbf16>
    %cst_51 = arith.constant dense<0.000000e+00> : vector<8x256xf32>
    %97 = tpu.matmul %96, %94, %cst_51 {dimension_numbers = #tpu.dot_dimension_numbers<[1], [0], [0], [1], [0, 0, 1, 1], [], []>} : vector<8x8xbf16>, vector<8x256xbf16>, vector<8x256xf32> -> vector<8x256xf32>
    %98 = arith.addf %91, %97 : vector<8x256xf32>
    %cst_52 = arith.constant 0.000000e+00 : bf16
    %99 = vector.broadcast %cst_52 : bf16 to vector<8x15xbf16>
    %100 = vector.extract_strided_slice %83 {offsets = [0, 0], sizes = [8, 241], strides = [1, 1]} : vector<8x256xbf16> to vector<8x241xbf16>
    %101 = tpu.concatenate %99, %100 in 1 : vector<8x15xbf16>, vector<8x241xbf16> -> vector<8x256xbf16>
    %102 = vector.broadcast %2 : vector<1x256xbf16> to vector<8x256xbf16>
    %103 = arith.mulf %101, %102 : vector<8x256xbf16>
    %c2_53 = arith.constant 2 : index
    %c0_54 = arith.constant 0 : index
    %c0_55 = arith.constant 0 : index
    %104 = vector.load %arg4[%c2_53, %c0_54, %c0_55] : memref<9x8x8xbf16, #tpu.memory_space<vmem>>, vector<1x8x8xbf16>
    %105 = vector.shape_cast %104 : vector<1x8x8xbf16> to vector<8x8xbf16>
    %cst_56 = arith.constant dense<0.000000e+00> : vector<8x256xf32>
    %106 = tpu.matmul %105, %103, %cst_56 {dimension_numbers = #tpu.dot_dimension_numbers<[1], [0], [0], [1], [0, 0, 1, 1], [], []>} : vector<8x8xbf16>, vector<8x256xbf16>, vector<8x256xf32> -> vector<8x256xf32>
    %107 = arith.addf %98, %106 : vector<8x256xf32>
    %cst_57 = arith.constant 0.000000e+00 : bf16
    %108 = vector.broadcast %cst_57 : bf16 to vector<8x1xbf16>
    %109 = vector.extract_strided_slice %83 {offsets = [0, 0], sizes = [8, 255], strides = [1, 1]} : vector<8x256xbf16> to vector<8x255xbf16>
    %110 = tpu.concatenate %108, %109 in 1 : vector<8x1xbf16>, vector<8x255xbf16> -> vector<8x256xbf16>
    %111 = vector.broadcast %1 : vector<1x256xbf16> to vector<8x256xbf16>
    %112 = arith.mulf %110, %111 : vector<8x256xbf16>
    %c3_58 = arith.constant 3 : index
    %c0_59 = arith.constant 0 : index
    %c0_60 = arith.constant 0 : index
    %113 = vector.load %arg4[%c3_58, %c0_59, %c0_60] : memref<9x8x8xbf16, #tpu.memory_space<vmem>>, vector<1x8x8xbf16>
    %114 = vector.shape_cast %113 : vector<1x8x8xbf16> to vector<8x8xbf16>
    %cst_61 = arith.constant dense<0.000000e+00> : vector<8x256xf32>
    %115 = tpu.matmul %114, %112, %cst_61 {dimension_numbers = #tpu.dot_dimension_numbers<[1], [0], [0], [1], [0, 0, 1, 1], [], []>} : vector<8x8xbf16>, vector<8x256xbf16>, vector<8x256xf32> -> vector<8x256xf32>
    %116 = arith.addf %107, %115 : vector<8x256xf32>
    %c4_62 = arith.constant 4 : index
    %c0_63 = arith.constant 0 : index
    %c0_64 = arith.constant 0 : index
    %117 = vector.load %arg4[%c4_62, %c0_63, %c0_64] : memref<9x8x8xbf16, #tpu.memory_space<vmem>>, vector<1x8x8xbf16>
    %118 = vector.shape_cast %117 : vector<1x8x8xbf16> to vector<8x8xbf16>
    %cst_65 = arith.constant dense<0.000000e+00> : vector<8x256xf32>
    %119 = tpu.matmul %118, %83, %cst_65 {dimension_numbers = #tpu.dot_dimension_numbers<[1], [0], [0], [1], [0, 0, 1, 1], [], []>} : vector<8x8xbf16>, vector<8x256xbf16>, vector<8x256xf32> -> vector<8x256xf32>
    %120 = arith.addf %116, %119 : vector<8x256xf32>
    %cst_66 = arith.constant 0.000000e+00 : bf16
    %121 = vector.broadcast %cst_66 : bf16 to vector<8x1xbf16>
    %122 = vector.extract_strided_slice %83 {offsets = [0, 1], sizes = [8, 255], strides = [1, 1]} : vector<8x256xbf16> to vector<8x255xbf16>
    %123 = tpu.concatenate %122, %121 in 1 : vector<8x255xbf16>, vector<8x1xbf16> -> vector<8x256xbf16>
    %124 = vector.broadcast %2 : vector<1x256xbf16> to vector<8x256xbf16>
    %125 = arith.mulf %123, %124 : vector<8x256xbf16>
    %c5_67 = arith.constant 5 : index
    %c0_68 = arith.constant 0 : index
    %c0_69 = arith.constant 0 : index
    %126 = vector.load %arg4[%c5_67, %c0_68, %c0_69] : memref<9x8x8xbf16, #tpu.memory_space<vmem>>, vector<1x8x8xbf16>
    %127 = vector.shape_cast %126 : vector<1x8x8xbf16> to vector<8x8xbf16>
    %cst_70 = arith.constant dense<0.000000e+00> : vector<8x256xf32>
    %128 = tpu.matmul %127, %125, %cst_70 {dimension_numbers = #tpu.dot_dimension_numbers<[1], [0], [0], [1], [0, 0, 1, 1], [], []>} : vector<8x8xbf16>, vector<8x256xbf16>, vector<8x256xf32> -> vector<8x256xf32>
    %129 = arith.addf %120, %128 : vector<8x256xf32>
    %cst_71 = arith.constant 0.000000e+00 : bf16
    %130 = vector.broadcast %cst_71 : bf16 to vector<8x15xbf16>
    %131 = vector.extract_strided_slice %83 {offsets = [0, 15], sizes = [8, 241], strides = [1, 1]} : vector<8x256xbf16> to vector<8x241xbf16>
    %132 = tpu.concatenate %131, %130 in 1 : vector<8x241xbf16>, vector<8x15xbf16> -> vector<8x256xbf16>
    %133 = vector.broadcast %1 : vector<1x256xbf16> to vector<8x256xbf16>
    %134 = arith.mulf %132, %133 : vector<8x256xbf16>
    %c6_72 = arith.constant 6 : index
    %c0_73 = arith.constant 0 : index
    %c0_74 = arith.constant 0 : index
    %135 = vector.load %arg4[%c6_72, %c0_73, %c0_74] : memref<9x8x8xbf16, #tpu.memory_space<vmem>>, vector<1x8x8xbf16>
    %136 = vector.shape_cast %135 : vector<1x8x8xbf16> to vector<8x8xbf16>
    %cst_75 = arith.constant dense<0.000000e+00> : vector<8x256xf32>
    %137 = tpu.matmul %136, %134, %cst_75 {dimension_numbers = #tpu.dot_dimension_numbers<[1], [0], [0], [1], [0, 0, 1, 1], [], []>} : vector<8x8xbf16>, vector<8x256xbf16>, vector<8x256xf32> -> vector<8x256xf32>
    %138 = arith.addf %129, %137 : vector<8x256xf32>
    %cst_76 = arith.constant 0.000000e+00 : bf16
    %139 = vector.broadcast %cst_76 : bf16 to vector<8x16xbf16>
    %140 = vector.extract_strided_slice %83 {offsets = [0, 16], sizes = [8, 240], strides = [1, 1]} : vector<8x256xbf16> to vector<8x240xbf16>
    %141 = tpu.concatenate %140, %139 in 1 : vector<8x240xbf16>, vector<8x16xbf16> -> vector<8x256xbf16>
    %c7_77 = arith.constant 7 : index
    %c0_78 = arith.constant 0 : index
    %c0_79 = arith.constant 0 : index
    %142 = vector.load %arg4[%c7_77, %c0_78, %c0_79] : memref<9x8x8xbf16, #tpu.memory_space<vmem>>, vector<1x8x8xbf16>
    %143 = vector.shape_cast %142 : vector<1x8x8xbf16> to vector<8x8xbf16>
    %cst_80 = arith.constant dense<0.000000e+00> : vector<8x256xf32>
    %144 = tpu.matmul %143, %141, %cst_80 {dimension_numbers = #tpu.dot_dimension_numbers<[1], [0], [0], [1], [0, 0, 1, 1], [], []>} : vector<8x8xbf16>, vector<8x256xbf16>, vector<8x256xf32> -> vector<8x256xf32>
    %145 = arith.addf %138, %144 : vector<8x256xf32>
    %cst_81 = arith.constant 0.000000e+00 : bf16
    %146 = vector.broadcast %cst_81 : bf16 to vector<8x17xbf16>
    %147 = vector.extract_strided_slice %83 {offsets = [0, 17], sizes = [8, 239], strides = [1, 1]} : vector<8x256xbf16> to vector<8x239xbf16>
    %148 = tpu.concatenate %147, %146 in 1 : vector<8x239xbf16>, vector<8x17xbf16> -> vector<8x256xbf16>
    %149 = vector.broadcast %2 : vector<1x256xbf16> to vector<8x256xbf16>
    %150 = arith.mulf %148, %149 : vector<8x256xbf16>
    %c8_82 = arith.constant 8 : index
    %c0_83 = arith.constant 0 : index
    %c0_84 = arith.constant 0 : index
    %151 = vector.load %arg4[%c8_82, %c0_83, %c0_84] : memref<9x8x8xbf16, #tpu.memory_space<vmem>>, vector<1x8x8xbf16>
    %152 = vector.shape_cast %151 : vector<1x8x8xbf16> to vector<8x8xbf16>
    %cst_85 = arith.constant dense<0.000000e+00> : vector<8x256xf32>
    %153 = tpu.matmul %152, %150, %cst_85 {dimension_numbers = #tpu.dot_dimension_numbers<[1], [0], [0], [1], [0, 0, 1, 1], [], []>} : vector<8x8xbf16>, vector<8x256xbf16>, vector<8x256xf32> -> vector<8x256xf32>
    %154 = arith.addf %145, %153 : vector<8x256xf32>
    %c0_86 = arith.constant 0 : index
    %c0_87 = arith.constant 0 : index
    %155 = vector.load %arg5[%c0_86, %c0_87] : memref<8x1xf32, #tpu.memory_space<vmem>>, vector<8x1xf32>
    %156 = vector.broadcast %155 : vector<8x1xf32> to vector<8x256xf32>
    %157 = arith.addf %154, %156 : vector<8x256xf32>
    %c0_88 = arith.constant 0 : index
    %c0_89 = arith.constant 0 : index
    %c0_90 = arith.constant 0 : index
    %158 = vector.load %arg7[%c0_88, %c0_89, %c0_90] : memref<1x8x256xf32, #tpu.memory_space<vmem>>, vector<1x8x256xf32>
    %159 = vector.shape_cast %158 : vector<1x8x256xf32> to vector<8x256xf32>
    %160 = vector.shape_cast %157 : vector<8x256xf32> to vector<1x8x256xf32>
    tpu.vector_store %arg7[%c0_88, %c0_89, %c0_90], %160 {strides = array<i32>} : memref<1x8x256xf32, #tpu.memory_space<vmem>>, vector<1x8x256xf32>,
    return
  }
  func.func @transform_0(%arg0: i32) -> (i32, i32, i32) {
    %c0_i32 = arith.constant 0 : i32
    %c0_i32_0 = arith.constant 0 : i32
    %c0_i32_1 = arith.constant 0 : i32
    return %arg0, %c0_i32, %c0_i32_0 : i32, i32, i32
  }
  func.func @transform_1(%arg0: i32) -> (i32, i32, i32) {
    %c0_i32 = arith.constant 0 : i32
    %c0_i32_0 = arith.constant 0 : i32
    %c0_i32_1 = arith.constant 0 : i32
    %c0_i32_2 = arith.constant 0 : i32
    return %c0_i32, %c0_i32_0, %c0_i32_1 : i32, i32, i32
  }
  func.func @transform_2(%arg0: i32) -> (i32, i32) {
    %c0_i32 = arith.constant 0 : i32
    %c0_i32_0 = arith.constant 0 : i32
    %c0_i32_1 = arith.constant 0 : i32
    return %c0_i32, %c0_i32_0 : i32, i32
  }
  func.func @transform_3(%arg0: i32) -> (i32, i32, i32) {
    %c0_i32 = arith.constant 0 : i32
    %c0_i32_0 = arith.constant 0 : i32
    %c0_i32_1 = arith.constant 0 : i32
    %c0_i32_2 = arith.constant 0 : i32
    return %c0_i32, %c0_i32_0, %c0_i32_1 : i32, i32, i32
  }
  func.func @transform_4(%arg0: i32) -> (i32, i32) {
    %c0_i32 = arith.constant 0 : i32
    %c0_i32_0 = arith.constant 0 : i32
    %c0_i32_1 = arith.constant 0 : i32
    return %c0_i32, %c0_i32_0 : i32, i32
  }
  func.func @transform_5(%arg0: i32) -> (i32, i32) {
    %c0_i32 = arith.constant 0 : i32
    %c0_i32_0 = arith.constant 0 : i32
    %c0_i32_1 = arith.constant 0 : i32
    return %c0_i32, %c0_i32_0 : i32, i32
  }
  func.func @transform_6(%arg0: i32) -> (i32, i32, i32) {
    %c0_i32 = arith.constant 0 : i32
    %c0_i32_0 = arith.constant 0 : i32
    %c0_i32_1 = arith.constant 0 : i32
    return %arg0, %c0_i32, %c0_i32_0 : i32, i32, i32
  }
}

</mosaic_0001>

<llo_original>
// kernel: block_forward.1
$region0: #{block_forward.1}
  #allocation0 [shape = 'u32[]', space=smem, size = 0x4, offset = 0x4, fixed_abs, tag = 'smem constant byte address 0x4 - core index']
  #allocation1 [shape = 'u32[144,128]{1,0:T(1,128)}', space=vmem, size = 0x12000, scoped, tag = 'internal scratch']
  %s0 = inlined_call_operand.vmem [shape: f32[2,4,256], index: 0, kind: input, shape index: {}]
  %s1 = inlined_call_operand.vmem [shape: f32[9,8,4], index: 1, kind: input, shape index: {}]
  %s2 = inlined_call_operand.vmem [shape: f32[8,1], index: 2, kind: input, shape index: {}]
  %s3 = inlined_call_operand.vmem [shape: bf16[9,8,8], index: 3, kind: input, shape index: {}]
  %s4 = inlined_call_operand.vmem [shape: f32[8,1], index: 4, kind: input, shape index: {}]
  %s5 = inlined_call_operand.vmem [shape: bf16[2,256], index: 5, kind: input, shape index: {}]
  %s6 = inlined_call_operand.vmem [shape: f32[2,8,256], index: 6, kind: output, shape index: {}]
  %s7 = sld [smem:[#allocation0]]
  $region57: #{block_forward.1} parent=0
    _
  %s9 = ssub.s32 1, %s7
  %s10 = scalar_select 0, %s9, %s7
  loop: start=0, step=1, limit=4
  $region2: #{block_forward.1} parent=0 // loop_pre_header
    _
  $region3: #{block_forward.1} parent=0 // loop_header
    %s12 = sphi 0, %s16
    %p13 = scmp.ge.s32.totalorder %s12, 4
    %s22 = sphi 0, %s24
    %s25 = sphi 0, %s22
    %s26 = sphi 0, %s25
    %s42 = sphi 0, %s26
    %s46 = sphi 0, %s46
    %s48 = sphi 0, %s46
    %s49 = sphi 0, %s48
    %s63 = sphi 0, %s49
    %s67 = sphi 0, %s67
    %s69 = sphi 0, %s67
    %s70 = sphi 0, %s69
    %s84 = sphi 0, %s70
    %s88 = sphi 0, %s88
    %s90 = sphi 0, %s88
    %s91 = sphi 0, %s90
    %s105 = sphi 0, %s91
    %s109 = sphi 0, %s109
    %s111 = sphi 0, %s109
    %s112 = sphi 0, %s111
    %s126 = sphi 0, %s112
    %s130 = sphi 0, %s130
    %s132 = sphi 0, %s130
    %s133 = sphi 0, %s132
    %s147 = sphi 0, %s133
    %s153 = sphi 0, %s155
    %s156 = sphi 0, %s153
    %s157 = sphi 0, %s156
    %s173 = sphi 0, %s157
  $region4: #{block_forward.1} parent=0 // loop_header_branch
    %15 = sbr.rel (%p13) target = $region8
  $region5: #{block_forward.1} parent=0 // loop_body
    %s17 = ssub.s32 %s12, 1
    %s18 = ssub.s32 %s12, 2
    %s19 = sadd.s32 %s12, 1
    %s20 = ssub.s32 %s12, %s19
    %p21 = scmp.eq.s32.totalorder %s20, 0
    %s23 = sadd.s32 %s22, 1
    %s24 = scalar_select %p21, %s22, %s23
    %p27 = pneg %p21
    %p28 = scmp.eq.s32.totalorder %s12, 1
    %p29 = por %p27, %p28
    %p30 = scmp.ne.s32.totalorder %s22, %s25
    %p31 = scmp.eq.s32.totalorder %s12, 0
    %p32 = por %p30, %p31
    %p33 = scmp.ne.s32.totalorder %s22, %s25
    %p34 = scmp.eq.s32.totalorder %s17, 1
    %p35 = por %p33, %p34
    %p36 = scmp.ne.s32.totalorder %s25, %s26
    %p37 = scmp.eq.s32.totalorder %s17, 0
    %p38 = por %p36, %p37
    %p39 = scmp.ne.s32.totalorder %s25, %s26
    %p40 = scmp.eq.s32.totalorder %s18, 1
    %p41 = por %p39, %p40
    %p43 = scmp.ne.s32.totalorder %s26, %s42
    %p44 = scmp.eq.s32.totalorder %s18, 0
    %p45 = por %p43, %p44
    %s47 = sadd.s32 %s46, 1
    %p50 = scmp.eq.s32.totalorder %s12, 1
    %p51 = scmp.ne.s32.totalorder %s46, %s48
    %p52 = scmp.eq.s32.totalorder %s12, 0
    %p53 = por %p51, %p52
    %p54 = scmp.ne.s32.totalorder %s46, %s48
    %p55 = scmp.eq.s32.totalorder %s17, 1
    %p56 = por %p54, %p55
    %p57 = scmp.ne.s32.totalorder %s48, %s49
    %p58 = scmp.eq.s32.totalorder %s17, 0
    %p59 = por %p57, %p58
    %p60 = scmp.ne.s32.totalorder %s48, %s49
    %p61 = scmp.eq.s32.totalorder %s18, 1
    %p62 = por %p60, %p61
    %p64 = scmp.ne.s32.totalorder %s49, %s63
    %p65 = scmp.eq.s32.totalorder %s18, 0
    %p66 = por %p64, %p65
    %s68 = sadd.s32 %s67, 1
    %p71 = scmp.eq.s32.totalorder %s12, 1
    %p72 = scmp.ne.s32.totalorder %s67, %s69
    %p73 = scmp.eq.s32.totalorder %s12, 0
    %p74 = por %p72, %p73
    %p75 = scmp.ne.s32.totalorder %s67, %s69
    %p76 = scmp.eq.s32.totalorder %s17, 1
    %p77 = por %p75, %p76
    %p78 = scmp.ne.s32.totalorder %s69, %s70
    %p79 = scmp.eq.s32.totalorder %s17, 0
    %p80 = por %p78, %p79
    %p81 = scmp.ne.s32.totalorder %s69, %s70
    %p82 = scmp.eq.s32.totalorder %s18, 1
    %p83 = por %p81, %p82
    %p85 = scmp.ne.s32.totalorder %s70, %s84
    %p86 = scmp.eq.s32.totalorder %s18, 0
    %p87 = por %p85, %p86
    %s89 = sadd.s32 %s88, 1
    %p92 = scmp.eq.s32.totalorder %s12, 1
    %p93 = scmp.ne.s32.totalorder %s88, %s90
    %p94 = scmp.eq.s32.totalorder %s12, 0
    %p95 = por %p93, %p94
    %p96 = scmp.ne.s32.totalorder %s88, %s90
    %p97 = scmp.eq.s32.totalorder %s17, 1
    %p98 = por %p96, %p97
    %p99 = scmp.ne.s32.totalorder %s90, %s91
    %p100 = scmp.eq.s32.totalorder %s17, 0
    %p101 = por %p99, %p100
    %p102 = scmp.ne.s32.totalorder %s90, %s91
    %p103 = scmp.eq.s32.totalorder %s18, 1
    %p104 = por %p102, %p103
    %p106 = scmp.ne.s32.totalorder %s91, %s105
    %p107 = scmp.eq.s32.totalorder %s18, 0
    %p108 = por %p106, %p107
    %s110 = sadd.s32 %s109, 1
    %p113 = scmp.eq.s32.totalorder %s12, 1
    %p114 = scmp.ne.s32.totalorder %s109, %s111
    %p115 = scmp.eq.s32.totalorder %s12, 0
    %p116 = por %p114, %p115
    %p117 = scmp.ne.s32.totalorder %s109, %s111
    %p118 = scmp.eq.s32.totalorder %s17, 1
    %p119 = por %p117, %p118
    %p120 = scmp.ne.s32.totalorder %s111, %s112
    %p121 = scmp.eq.s32.totalorder %s17, 0
    %p122 = por %p120, %p121
    %p123 = scmp.ne.s32.totalorder %s111, %s112
    %p124 = scmp.eq.s32.totalorder %s18, 1
    %p125 = por %p123, %p124
    %p127 = scmp.ne.s32.totalorder %s112, %s126
    %p128 = scmp.eq.s32.totalorder %s18, 0
    %p129 = por %p127, %p128
    %s131 = sadd.s32 %s130, 1
    %p134 = scmp.eq.s32.totalorder %s12, 1
    %p135 = scmp.ne.s32.totalorder %s130, %s132
    %p136 = scmp.eq.s32.totalorder %s12, 0
    %p137 = por %p135, %p136
    %p138 = scmp.ne.s32.totalorder %s130, %s132
    %p139 = scmp.eq.s32.totalorder %s17, 1
    %p140 = por %p138, %p139
    %p141 = scmp.ne.s32.totalorder %s132, %s133
    %p142 = scmp.eq.s32.totalorder %s17, 0
    %p143 = por %p141, %p142
    %p144 = scmp.ne.s32.totalorder %s132, %s133
    %p145 = scmp.eq.s32.totalorder %s18, 1
    %p146 = por %p144, %p145
    %p148 = scmp.ne.s32.totalorder %s133, %s147
    %p149 = scmp.eq.s32.totalorder %s18, 0
    %p150 = por %p148, %p149
    %s151 = ssub.s32 %s12, %s19
    %p152 = scmp.eq.s32.totalorder %s151, 0
    %s154 = sadd.s32 %s153, 1
    %s155 = scalar_select %p152, %s153, %s154
    %p158 = pneg %p152
    %p159 = scmp.eq.s32.totalorder %s12, 1
    %p160 = por %p158, %p159
    %p161 = scmp.ne.s32.totalorder %s153, %s156
    %p162 = scmp.eq.s32.totalorder %s12, 0
    %p163 = por %p161, %p162
    %p164 = scmp.ne.s32.totalorder %s153, %s156
    %p165 = scmp.eq.s32.totalorder %s17, 1
    %p166 = por %p164, %p165
    %p167 = scmp.ne.s32.totalorder %s156, %s157
    %p168 = scmp.eq.s32.totalorder %s17, 0
    %p169 = por %p167, %p168
    %p170 = scmp.ne.s32.totalorder %s156, %s157
    %p171 = scmp.eq.s32.totalorder %s18, 1
    %p172 = por %p170, %p171
    %p174 = scmp.ne.s32.totalorder %s157, %s173
    %p175 = scmp.eq.s32.totalorder %s18, 0
    %p176 = por %p174, %p175
    %p177 = scmp.le.s32.totalorder 1, %s12
    %p178 = scmp.lt.s32.totalorder %s12, 3
    %p179 = pnand %p177, %p178
    %p180 = pneg %p179
    // Predicated region
    $region9: #{block_forward.1} parent=5 // pred_check
      _
    $region10: #{block_forward.1} parent=5 // pred_check_branch
      %182 = sbr.rel (%p179) target = $region12
    $region11: #{block_forward.1} parent=5 // pred_region
      %s183 = ssub.s32 %s12, 1
      // Predicated region
      $region13: #{block_forward.1} parent=11 // pred_check
        %p184 = pneg %p59
      $region14: #{block_forward.1} parent=11 // pred_check_branch
        %186 = sbr.rel (%p184) target = $region16
      $region15: #{block_forward.1} parent=11 // pred_region
        _
      $region16: #{block_forward.1} parent=11 // pred_fallthru
        _
      // Predicated region
      $region17: #{block_forward.1} parent=11 // pred_check
        %p187 = pneg %p80
      $region18: #{block_forward.1} parent=11 // pred_check_branch
        %189 = sbr.rel (%p187) target = $region20
      $region19: #{block_forward.1} parent=11 // pred_region
        _
      $region20: #{block_forward.1} parent=11 // pred_fallthru
        _
      // Predicated region
      $region21: #{block_forward.1} parent=11 // pred_check
        %p190 = pneg %p101
      $region22: #{block_forward.1} parent=11 // pred_check_branch
        %192 = sbr.rel (%p190) target = $region24
      $region23: #{block_forward.1} parent=11 // pred_region
        _
      $region24: #{block_forward.1} parent=11 // pred_fallthru
        _
      // Predicated region
      $region25: #{block_forward.1} parent=11 // pred_check
        %p193 = pneg %p122
      $region26: #{block_forward.1} parent=11 // pred_check_branch
        %195 = sbr.rel (%p193) target = $region28
      $region27: #{block_forward.1} parent=11 // pred_region
        _
      $region28: #{block_forward.1} parent=11 // pred_fallthru
        _
      // Predicated region
      $region29: #{block_forward.1} parent=11 // pred_check
        %p196 = pneg %p143
      $region30: #{block_forward.1} parent=11 // pred_check_branch
        %198 = sbr.rel (%p196) target = $region32
      $region31: #{block_forward.1} parent=11 // pred_region
        _
      $region32: #{block_forward.1} parent=11 // pred_fallthru
        _
    $region12: #{block_forward.1} parent=5 // pred_fallthru
      _
    %p199 = scmp.lt.s32.totalorder %s12, 2
    // Predicated region
    $region33: #{block_forward.1} parent=5 // pred_check
      %p200 = pneg %p199
    $region34: #{block_forward.1} parent=5 // pred_check_branch
      %202 = sbr.rel (%p200) target = $region36
    $region35: #{block_forward.1} parent=5 // pred_region
      // Predicated region
      $region37: #{block_forward.1} parent=35 // pred_check
        %p203 = pneg %p32
      $region38: #{block_forward.1} parent=35 // pred_check_branch
        %205 = sbr.rel (%p203) target = $region40
      $region39: #{block_forward.1} parent=35 // pred_region
        %p206 = scmp.lt.s32.totalorder %s12, 1
        %s207 = scalar_select %p206, %s12, 1
        %s208 = smul.addr %s207, 2
        %s209 = smul.addr %s208, 4
        %s210 = scalar_lea.vmem %s0, %s209
      $region40: #{block_forward.1} parent=35 // pred_fallthru
        _
    $region36: #{block_forward.1} parent=5 // pred_fallthru
      _
    %p211 = scmp.le.s32.totalorder 1, %s12
    %p212 = scmp.lt.s32.totalorder %s12, 3
    %p213 = pnand %p211, %p212
    %p214 = pneg %p213
    // Predicated region
    $region41: #{block_forward.1} parent=5 // pred_check
      _
    $region42: #{block_forward.1} parent=5 // pred_check_branch
      %216 = sbr.rel (%p213) target = $region44
    $region43: #{block_forward.1} parent=5 // pred_region
      %s217 = ssub.s32 %s12, 1
      %p218 = scmp.lt.s32.totalorder %s17, 1
      %s219 = scalar_select %p218, %s17, 1
      %s220 = smul.addr %s219, 2
      %s221 = smul.addr %s220, 4
      %s222 = scalar_lea.vmem %s0, %s221
      %p223 = pneg %p38
      %p224 = pneg %p35
      %p225 = pneg %p59
      %p226 = pneg %p56
      %p227 = pneg %p80
      %p228 = pneg %p77
      %p229 = pneg %p101
      %p230 = pneg %p98
      %p231 = pneg %p122
      %p232 = pneg %p119
      %p233 = pneg %p143
      %p234 = pneg %p140
      %p235 = pneg %p169
      %p236 = pneg %p166
      %p237 = scmp.lt.s32.totalorder %s17, 1
      %s238 = scalar_select %p237, %s17, 1
      %s239 = smul.addr %s238, 2
      %s240 = smul.addr %s239, 8
      %s241 = scalar_lea.vmem %s6, %s240
      %p242 = scmp.lt.s32.totalorder %s17, 1
      %s243 = scalar_select %p242, %s17, 1
      %s244 = smul.addr %s243, 2
      %s245 = smul.addr %s244, 4
      %s246 = scalar_lea.vmem %s0, %s245
      %p247 = scmp.lt.s32.totalorder %s17, 1
      %s248 = scalar_select %p247, %s17, 1
      %s249 = smul.addr %s248, 2
      %s250 = smul.addr %s249, 8
      %s251 = scalar_lea.vmem %s6, %s250
      %v253 = vld [vmem:[%s5] sm:$0x3]
      %v254 = vunpack.c.l.bf16 %v253
      %v255 = vld [vmem:[%s246] sm:$0xff]
      %v257 = vcombine.high %v255, %v255
      %258 = vrot.lane.b32.xlu0 %v255, 17
      %v259 = vpop.permute.xlu0 %258
      %260 = vrot.lane.b32.xlu0 %v257, 17
      %v261 = vpop.permute.xlu0 %260
      %vm262 = vcmask 138240
      %v263 = vsel %vm262, %v259, %v261
      %v266 = vsel %vm262, 0.0, %v259
      %v268 = vlaneseq
      %v269 = vshrl.u32 %v268, 7
      %v270 = vsub.s32 0, %v269
      %v271 = vrot.slane %v254, %v270
      %v272 = vlaneseq
      %v273 = vshrl.u32 %v272, 7
      %v274 = vsub.s32 2, %v273
      %v275 = vrot.slane %v254, %v274
      %v278 = vlaneseq
      %v279 = vshrl.u32 %v278, 7
      %v280 = vsub.s32 0, %v279
      %v281 = vrot.slane %v271, %v280
      %v282 = vlaneseq
      %v283 = vshrl.u32 %v282, 7
      %v284 = vsub.s32 0, %v283
      %v285 = vrot.slane %v275, %v284
      %v286 = vmul.f32 %v266, %v281
      %v287 = vmul.f32 %v263, %v285
      %v288 = vld [vmem:[%s1] sm:$0xff]
      %289 = vrot.lane.b32.xlu0 %v255, 16
      %v290 = vpop.permute.xlu0 %289
      %291 = vrot.lane.b32.xlu0 %v257, 16
      %v292 = vpop.permute.xlu0 %291
      %vm293 = vcmask 130048
      %v294 = vsel %vm293, %v290, %v292
      %v296 = vsel %vm293, 0.0, %v290
      %s297 = scalar_lea.vmem %s1, 8
      %v298 = vld [vmem:[%s297] sm:$0xff]
      %vm299 = vcmask 31744
      %v301 = vsel %vm299, %v298, 0
      %vm303 = vcmask 1043456
      %v305 = vsel %vm303, %v296, 0
      %v307 = vsel %vm303, %v294, 0
      %309 = vmatprep.subr.mxu0 %v307
      %310 = vmatpush1.msra.mxu0 %v305
      %311 = vmatprep.subr.mxu0 0.0
      %312 = vmatpush1.msra.mxu0 0.0
      %313 = vmatprep.subr.mxu0 0.0
      %314 = vmatpush1.msra.mxu0 0.0
      %315 = vmatprep.subr.mxu0 0.0
      %316 = vmatpush1.msra.mxu0 0.0
      %317 = vmatprep.subr.mxu0 0.0
      %318 = vmatpush1.msra.mxu0 0.0
      %319 = vmatprep.subr.mxu0 0.0
      %320 = vmatpush1.msra.mxu0 0.0
      %321 = vmatprep.subr.mxu0 0.0
      %322 = vmatpush1.msra.mxu0 0.0
      %323 = vmatprep.subr.mxu0 0.0
      %324 = vmatpush1.msra.mxu0 0.0
      %325 = vmatprep.subr.mxu0 0.0
      %326 = vmatpush1.msra.mxu0 0.0
      %327 = vmatprep.subr.mxu0 0.0
      %328 = vmatpush1.msra.mxu0 0.0
      %329 = vmatprep.subr.mxu0 0.0
      %330 = vmatpush1.msra.mxu0 0.0
      %331 = vmatprep.subr.mxu0 0.0
      %332 = vmatpush1.msra.mxu0 0.0
      %333 = vmatprep.subr.mxu0 0.0
      %334 = vmatpush1.msra.mxu0 0.0
      %335 = vmatprep.subr.mxu0 0.0
      %336 = vmatpush1.msra.mxu0 0.0
      %337 = vmatprep.subr.mxu0 0.0
      %338 = vmatpush1.msra.mxu0 0.0
      %339 = vmatprep.subr.mxu0 0.0
      %340 = vmatpush1.msra.mxu0 0.0
      %341 = vmatprep.subr.mxu0 0.0
      %342 = vmatpush1.msra.mxu0 0.0
      %343 = vmatprep.subr.mxu0 0.0
      %344 = vmatpush1.msra.mxu0 0.0
      %345 = vmatprep.subr.mxu0 0.0
      %346 = vmatpush1.msra.mxu0 0.0
      %347 = vmatprep.subr.mxu0 0.0
      %348 = vmatpush1.msra.mxu0 0.0
      %349 = vmatprep.subr.mxu0 0.0
      %350 = vmatpush1.msra.mxu0 0.0
      %351 = vmatprep.subr.mxu0 0.0
      %352 = vmatpush1.msra.mxu0 0.0
      %353 = vmatprep.subr.mxu0 0.0
      %354 = vmatpush1.msra.mxu0 0.0
      %355 = vmatprep.subr.mxu0 0.0
      %356 = vmatpush1.msra.mxu0 0.0
      %357 = vmatprep.subr.mxu0 0.0
      %358 = vmatpush1.msra.mxu0 0.0
      %359 = vmatprep.subr.mxu0 0.0
      %360 = vmatpush1.msra.mxu0 0.0
      %361 = vmatprep.subr.mxu0 0.0
      %362 = vmatpush1.msra.mxu0 0.0
      %363 = vmatprep.subr.mxu0 0.0
      %364 = vmatpush1.msra.mxu0 0.0
      %365 = vmatprep.subr.mxu0 0.0
      %366 = vmatpush1.msra.mxu0 0.0
      %367 = vmatprep.subr.mxu0 0.0
      %368 = vmatpush1.msra.mxu0 0.0
      %369 = vmatprep.subr.mxu0 0.0
      %370 = vmatpush1.msra.mxu0 0.0
      %371 = vmatprep.subr.mxu0 0.0
      %372 = vmatpush1.msra.mxu0 0.0
      %373 = vmatprep.mubr.f32.mxu0 0.0
      %374 = vmatmul.mubr.f32.gmra.mrb[0].mxu0 %v301
      %v375 = vpop.f32.mrb[0].mxu0
      %v376 = vadd.f32 0.0, %v375
      %v377 = vpop.f32.mrb[0].mxu0
      %v378 = vadd.f32 0.0, %v377
      %379 = vdwg.mxu0
      %v381 = vsel %vm299, %v288, 0
      %v384 = vsel %vm303, %v286, 0
      %v387 = vsel %vm303, %v287, 0
      %389 = vmatprep.subr.mxu0 %v387
      %390 = vmatpush1.msra.mxu0 %v384
      %391 = vmatprep.subr.mxu0 0.0
      %392 = vmatpush1.msra.mxu0 0.0
      %393 = vmatprep.subr.mxu0 0.0
      %394 = vmatpush1.msra.mxu0 0.0
      %395 = vmatprep.subr.mxu0 0.0
      %396 = vmatpush1.msra.mxu0 0.0
      %397 = vmatprep.subr.mxu0 0.0
      %398 = vmatpush1.msra.mxu0 0.0
      %399 = vmatprep.subr.mxu0 0.0
      %400 = vmatpush1.msra.mxu0 0.0
      %401 = vmatprep.subr.mxu0 0.0
      %402 = vmatpush1.msra.mxu0 0.0
      %403 = vmatprep.subr.mxu0 0.0
      %404 = vmatpush1.msra.mxu0 0.0
      %405 = vmatprep.subr.mxu0 0.0
      %406 = vmatpush1.msra.mxu0 0.0
      %407 = vmatprep.subr.mxu0 0.0
      %408 = vmatpush1.msra.mxu0 0.0
      %409 = vmatprep.subr.mxu0 0.0
      %410 = vmatpush1.msra.mxu0 0.0
      %411 = vmatprep.subr.mxu0 0.0
      %412 = vmatpush1.msra.mxu0 0.0
      %413 = vmatprep.subr.mxu0 0.0
      %414 = vmatpush1.msra.mxu0 0.0
      %415 = vmatprep.subr.mxu0 0.0
      %416 = vmatpush1.msra.mxu0 0.0
      %417 = vmatprep.subr.mxu0 0.0
      %418 = vmatpush1.msra.mxu0 0.0
      %419 = vmatprep.subr.mxu0 0.0
      %420 = vmatpush1.msra.mxu0 0.0
      %421 = vmatprep.subr.mxu0 0.0
      %422 = vmatpush1.msra.mxu0 0.0
      %423 = vmatprep.subr.mxu0 0.0
      %424 = vmatpush1.msra.mxu0 0.0
      %425 = vmatprep.subr.mxu0 0.0
      %426 = vmatpush1.msra.mxu0 0.0
      %427 = vmatprep.subr.mxu0 0.0
      %428 = vmatpush1.msra.mxu0 0.0
      %429 = vmatprep.subr.mxu0 0.0
      %430 = vmatpush1.msra.mxu0 0.0
      %431 = vmatprep.subr.mxu0 0.0
      %432 = vmatpush1.msra.mxu0 0.0
      %433 = vmatprep.subr.mxu0 0.0
      %434 = vmatpush1.msra.mxu0 0.0
      %435 = vmatprep.subr.mxu0 0.0
      %436 = vmatpush1.msra.mxu0 0.0
      %437 = vmatprep.subr.mxu0 0.0
      %438 = vmatpush1.msra.mxu0 0.0
      %439 = vmatprep.subr.mxu0 0.0
      %440 = vmatpush1.msra.mxu0 0.0
      %441 = vmatprep.subr.mxu0 0.0
      %442 = vmatpush1.msra.mxu0 0.0
      %443 = vmatprep.subr.mxu0 0.0
      %444 = vmatpush1.msra.mxu0 0.0
      %445 = vmatprep.subr.mxu0 0.0
      %446 = vmatpush1.msra.mxu0 0.0
      %447 = vmatprep.subr.mxu0 0.0
      %448 = vmatpush1.msra.mxu0 0.0
      %449 = vmatprep.subr.mxu0 0.0
      %450 = vmatpush1.msra.mxu0 0.0
      %451 = vmatprep.subr.mxu0 0.0
      %452 = vmatpush1.msra.mxu0 0.0
      %453 = vmatprep.mubr.f32.mxu0 0.0
      %454 = vmatmul.mubr.f32.gmra.mrb[0].mxu0 %v381
      %v455 = vpop.f32.mrb[0].mxu0
      %v456 = vadd.f32 %v376, %v455
      %v457 = vpop.f32.mrb[0].mxu0
      %v458 = vadd.f32 %v378, %v457
      %459 = vdwg.mxu0
      %460 = vrot.lane.b32.xlu0 %v255, 15
      %v461 = vpop.permute.xlu0 %460
      %462 = vrot.lane.b32.xlu0 %v257, 15
      %v463 = vpop.permute.xlu0 %462
      %vm464 = vcmask 121856
      %v465 = vsel %vm464, %v461, %v463
      %v468 = vsel %vm464, 0.0, %v461
      %v469 = vlaneseq
      %v470 = vshrl.u32 %v469, 7
      %v471 = vsub.s32 1, %v470
      %v472 = vrot.slane %v254, %v471
      %v473 = vlaneseq
      %v474 = vshrl.u32 %v473, 7
      %v475 = vsub.s32 3, %v474
      %v476 = vrot.slane %v254, %v475
      %v479 = vlaneseq
      %v480 = vshrl.u32 %v479, 7
      %v481 = vsub.s32 1, %v480
      %v482 = vrot.slane %v472, %v481
      %v483 = vlaneseq
      %v484 = vshrl.u32 %v483, 7
      %v485 = vsub.s32 1, %v484
      %v486 = vrot.slane %v476, %v485
      %v487 = vmul.f32 %v468, %v482
      %v488 = vmul.f32 %v465, %v486
      %s489 = scalar_lea.vmem %s1, 16
      %v490 = vld [vmem:[%s489] sm:$0xff]
      %v492 = vsel %vm299, %v490, 0
      %v495 = vsel %vm303, %v487, 0
      %v498 = vsel %vm303, %v488, 0
      %500 = vmatprep.subr.mxu0 %v498
      %501 = vmatpush1.msra.mxu0 %v495
      %502 = vmatprep.subr.mxu0 0.0
      %503 = vmatpush1.msra.mxu0 0.0
      %504 = vmatprep.subr.mxu0 0.0
      %505 = vmatpush1.msra.mxu0 0.0
      %506 = vmatprep.subr.mxu0 0.0
      %507 = vmatpush1.msra.mxu0 0.0
      %508 = vmatprep.subr.mxu0 0.0
      %509 = vmatpush1.msra.mxu0 0.0
      %510 = vmatprep.subr.mxu0 0.0
      %511 = vmatpush1.msra.mxu0 0.0
      %512 = vmatprep.subr.mxu0 0.0
      %513 = vmatpush1.msra.mxu0 0.0
      %514 = vmatprep.subr.mxu0 0.0
      %515 = vmatpush1.msra.mxu0 0.0
      %516 = vmatprep.subr.mxu0 0.0
      %517 = vmatpush1.msra.mxu0 0.0
      %518 = vmatprep.subr.mxu0 0.0
      %519 = vmatpush1.msra.mxu0 0.0
      %520 = vmatprep.subr.mxu0 0.0
      %521 = vmatpush1.msra.mxu0 0.0
      %522 = vmatprep.subr.mxu0 0.0
      %523 = vmatpush1.msra.mxu0 0.0
      %524 = vmatprep.subr.mxu0 0.0
      %525 = vmatpush1.msra.mxu0 0.0
      %526 = vmatprep.subr.mxu0 0.0
      %527 = vmatpush1.msra.mxu0 0.0
      %528 = vmatprep.subr.mxu0 0.0
      %529 = vmatpush1.msra.mxu0 0.0
      %530 = vmatprep.subr.mxu0 0.0
      %531 = vmatpush1.msra.mxu0 0.0
      %532 = vmatprep.subr.mxu0 0.0
      %533 = vmatpush1.msra.mxu0 0.0
      %534 = vmatprep.subr.mxu0 0.0
      %535 = vmatpush1.msra.mxu0 0.0
      %536 = vmatprep.subr.mxu0 0.0
      %537 = vmatpush1.msra.mxu0 0.0
      %538 = vmatprep.subr.mxu0 0.0
      %539 = vmatpush1.msra.mxu0 0.0
      %540 = vmatprep.subr.mxu0 0.0
      %541 = vmatpush1.msra.mxu0 0.0
      %542 = vmatprep.subr.mxu0 0.0
      %543 = vmatpush1.msra.mxu0 0.0
      %544 = vmatprep.subr.mxu0 0.0
      %545 = vmatpush1.msra.mxu0 0.0
      %546 = vmatprep.subr.mxu0 0.0
      %547 = vmatpush1.msra.mxu0 0.0
      %548 = vmatprep.subr.mxu0 0.0
      %549 = vmatpush1.msra.mxu0 0.0
      %550 = vmatprep.subr.mxu0 0.0
      %551 = vmatpush1.msra.mxu0 0.0
      %552 = vmatprep.subr.mxu0 0.0
      %553 = vmatpush1.msra.mxu0 0.0
      %554 = vmatprep.subr.mxu0 0.0
      %555 = vmatpush1.msra.mxu0 0.0
      %556 = vmatprep.subr.mxu0 0.0
      %557 = vmatpush1.msra.mxu0 0.0
      %558 = vmatprep.subr.mxu0 0.0
      %559 = vmatpush1.msra.mxu0 0.0
      %560 = vmatprep.subr.mxu0 0.0
      %561 = vmatpush1.msra.mxu0 0.0
      %562 = vmatprep.subr.mxu0 0.0
      %563 = vmatpush1.msra.mxu0 0.0
      %564 = vmatprep.mubr.f32.mxu0 0.0
      %565 = vmatmul.mubr.f32.gmra.mrb[0].mxu0 %v492
      %v566 = vpop.f32.mrb[0].mxu0
      %v567 = vadd.f32 0.0, %v566
      %v568 = vpop.f32.mrb[0].mxu0
      %v569 = vadd.f32 0.0, %v568
      %570 = vdwg.mxu0
      %v571 = vadd.f32 %v456, %v567
      %v572 = vadd.f32 %v458, %v569
      %573 = vrot.lane.b32.xlu0 %v255, 1
      %v574 = vpop.permute.xlu0 %573
      %575 = vrot.lane.b32.xlu0 %v257, 1
      %v576 = vpop.permute.xlu0 %575
      %vm577 = vcmask 7168
      %v578 = vsel %vm577, %v574, %v576
      %v581 = vsel %vm577, 0.0, %v574
      %v582 = vmul.f32 %v581, %v281
      %v583 = vmul.f32 %v578, %v285
      %s584 = scalar_lea.vmem %s1, 24
      %v585 = vld [vmem:[%s584] sm:$0xff]
      %v587 = vsel %vm299, %v585, 0
      %v590 = vsel %vm303, %v582, 0
      %v593 = vsel %vm303, %v583, 0
      %595 = vmatprep.subr.mxu0 %v593
      %596 = vmatpush1.msra.mxu0 %v590
      %597 = vmatprep.subr.mxu0 0.0
      %598 = vmatpush1.msra.mxu0 0.0
      %599 = vmatprep.subr.mxu0 0.0
      %600 = vmatpush1.msra.mxu0 0.0
      %601 = vmatprep.subr.mxu0 0.0
      %602 = vmatpush1.msra.mxu0 0.0
      %603 = vmatprep.subr.mxu0 0.0
      %604 = vmatpush1.msra.mxu0 0.0
      %605 = vmatprep.subr.mxu0 0.0
      %606 = vmatpush1.msra.mxu0 0.0
      %607 = vmatprep.subr.mxu0 0.0
      %608 = vmatpush1.msra.mxu0 0.0
      %609 = vmatprep.subr.mxu0 0.0
      %610 = vmatpush1.msra.mxu0 0.0
      %611 = vmatprep.subr.mxu0 0.0
      %612 = vmatpush1.msra.mxu0 0.0
      %613 = vmatprep.subr.mxu0 0.0
      %614 = vmatpush1.msra.mxu0 0.0
      %615 = vmatprep.subr.mxu0 0.0
      %616 = vmatpush1.msra.mxu0 0.0
      %617 = vmatprep.subr.mxu0 0.0
      %618 = vmatpush1.msra.mxu0 0.0
      %619 = vmatprep.subr.mxu0 0.0
      %620 = vmatpush1.msra.mxu0 0.0
      %621 = vmatprep.subr.mxu0 0.0
      %622 = vmatpush1.msra.mxu0 0.0
      %623 = vmatprep.subr.mxu0 0.0
      %624 = vmatpush1.msra.mxu0 0.0
      %625 = vmatprep.subr.mxu0 0.0
      %626 = vmatpush1.msra.mxu0 0.0
      %627 = vmatprep.subr.mxu0 0.0
      %628 = vmatpush1.msra.mxu0 0.0
      %629 = vmatprep.subr.mxu0 0.0
      %630 = vmatpush1.msra.mxu0 0.0
      %631 = vmatprep.subr.mxu0 0.0
      %632 = vmatpush1.msra.mxu0 0.0
      %633 = vmatprep.subr.mxu0 0.0
      %634 = vmatpush1.msra.mxu0 0.0
      %635 = vmatprep.subr.mxu0 0.0
      %636 = vmatpush1.msra.mxu0 0.0
      %637 = vmatprep.subr.mxu0 0.0
      %638 = vmatpush1.msra.mxu0 0.0
      %639 = vmatprep.subr.mxu0 0.0
      %640 = vmatpush1.msra.mxu0 0.0
      %641 = vmatprep.subr.mxu0 0.0
      %642 = vmatpush1.msra.mxu0 0.0
      %643 = vmatprep.subr.mxu0 0.0
      %644 = vmatpush1.msra.mxu0 0.0
      %645 = vmatprep.subr.mxu0 0.0
      %646 = vmatpush1.msra.mxu0 0.0
      %647 = vmatprep.subr.mxu0 0.0
      %648 = vmatpush1.msra.mxu0 0.0
      %649 = vmatprep.subr.mxu0 0.0
      %650 = vmatpush1.msra.mxu0 0.0
      %651 = vmatprep.subr.mxu0 0.0
      %652 = vmatpush1.msra.mxu0 0.0
      %653 = vmatprep.subr.mxu0 0.0
      %654 = vmatpush1.msra.mxu0 0.0
      %655 = vmatprep.subr.mxu0 0.0
      %656 = vmatpush1.msra.mxu0 0.0
      %657 = vmatprep.subr.mxu0 0.0
      %658 = vmatpush1.msra.mxu0 0.0
      %659 = vmatprep.mubr.f32.mxu0 0.0
      %660 = vmatmul.mubr.f32.gmra.mrb[0].mxu0 %v587
      %v661 = vpop.f32.mrb[0].mxu0
      %v662 = vadd.f32 0.0, %v661
      %v663 = vpop.f32.mrb[0].mxu0
      %v664 = vadd.f32 0.0, %v663
      %665 = vdwg.mxu0
      %v666 = vadd.f32 %v571, %v662
      %v667 = vadd.f32 %v572, %v664
      %s668 = scalar_lea.vmem %s1, 32
      %v669 = vld [vmem:[%s668] sm:$0xff]
      %v671 = vsel %vm299, %v669, 0
      %v673 = vsel %vm303, %v255, 0
      %v675 = vsel %vm303, %v257, 0
      %677 = vmatprep.subr.mxu0 %v675
      %678 = vmatpush1.msra.mxu0 %v673
      %679 = vmatprep.subr.mxu0 0.0
      %680 = vmatpush1.msra.mxu0 0.0
      %681 = vmatprep.subr.mxu0 0.0
      %682 = vmatpush1.msra.mxu0 0.0
      %683 = vmatprep.subr.mxu0 0.0
      %684 = vmatpush1.msra.mxu0 0.0
      %685 = vmatprep.subr.mxu0 0.0
      %686 = vmatpush1.msra.mxu0 0.0
      %687 = vmatprep.subr.mxu0 0.0
      %688 = vmatpush1.msra.mxu0 0.0
      %689 = vmatprep.subr.mxu0 0.0
      %690 = vmatpush1.msra.mxu0 0.0
      %691 = vmatprep.subr.mxu0 0.0
      %692 = vmatpush1.msra.mxu0 0.0
      %693 = vmatprep.subr.mxu0 0.0
      %694 = vmatpush1.msra.mxu0 0.0
      %695 = vmatprep.subr.mxu0 0.0
      %696 = vmatpush1.msra.mxu0 0.0
      %697 = vmatprep.subr.mxu0 0.0
      %698 = vmatpush1.msra.mxu0 0.0
      %699 = vmatprep.subr.mxu0 0.0
      %700 = vmatpush1.msra.mxu0 0.0
      %701 = vmatprep.subr.mxu0 0.0
      %702 = vmatpush1.msra.mxu0 0.0
      %703 = vmatprep.subr.mxu0 0.0
      %704 = vmatpush1.msra.mxu0 0.0
      %705 = vmatprep.subr.mxu0 0.0
      %706 = vmatpush1.msra.mxu0 0.0
      %707 = vmatprep.subr.mxu0 0.0
      %708 = vmatpush1.msra.mxu0 0.0
      %709 = vmatprep.subr.mxu0 0.0
      %710 = vmatpush1.msra.mxu0 0.0
      %711 = vmatprep.subr.mxu0 0.0
      %712 = vmatpush1.msra.mxu0 0.0
      %713 = vmatprep.subr.mxu0 0.0
      %714 = vmatpush1.msra.mxu0 0.0
      %715 = vmatprep.subr.mxu0 0.0
      %716 = vmatpush1.msra.mxu0 0.0
      %717 = vmatprep.subr.mxu0 0.0
      %718 = vmatpush1.msra.mxu0 0.0
      %719 = vmatprep.subr.mxu0 0.0
      %720 = vmatpush1.msra.mxu0 0.0
      %721 = vmatprep.subr.mxu0 0.0
      %722 = vmatpush1.msra.mxu0 0.0
      %723 = vmatprep.subr.mxu0 0.0
      %724 = vmatpush1.msra.mxu0 0.0
      %725 = vmatprep.subr.mxu0 0.0
      %726 = vmatpush1.msra.mxu0 0.0
      %727 = vmatprep.subr.mxu0 0.0
      %728 = vmatpush1.msra.mxu0 0.0
      %729 = vmatprep.subr.mxu0 0.0
      %730 = vmatpush1.msra.mxu0 0.0
      %731 = vmatprep.subr.mxu0 0.0
      %732 = vmatpush1.msra.mxu0 0.0
      %733 = vmatprep.subr.mxu0 0.0
      %734 = vmatpush1.msra.mxu0 0.0
      %735 = vmatprep.subr.mxu0 0.0
      %736 = vmatpush1.msra.mxu0 0.0
      %737 = vmatprep.subr.mxu0 0.0
      %738 = vmatpush1.msra.mxu0 0.0
      %739 = vmatprep.subr.mxu0 0.0
      %740 = vmatpush1.msra.mxu0 0.0
      %741 = vmatprep.mubr.f32.mxu0 0.0
      %742 = vmatmul.mubr.f32.gmra.mrb[0].mxu0 %v671
      %v743 = vpop.f32.mrb[0].mxu0
      %v744 = vadd.f32 0.0, %v743
      %v745 = vpop.f32.mrb[0].mxu0
      %v746 = vadd.f32 0.0, %v745
      %747 = vdwg.mxu0
      %v748 = vadd.f32 %v666, %v744
      %v749 = vadd.f32 %v667, %v746
      %750 = vrot.lane.b32.xlu0 %v255, 127
      %v751 = vpop.permute.xlu0 %750
      %752 = vrot.lane.b32.xlu0 %v257, 127
      %v753 = vpop.permute.xlu0 %752
      %vm754 = vcmask 1039360
      %v755 = vsel %vm754, %v751, %v753
      %v758 = vsel %vm754, %v753, 0.0
      %v759 = vmul.f32 %v755, %v482
      %v760 = vmul.f32 %v758, %v486
      %s761 = scalar_lea.vmem %s1, 40
      %v762 = vld [vmem:[%s761] sm:$0xff]
      %v764 = vsel %vm299, %v762, 0
      %v767 = vsel %vm303, %v759, 0
      %v770 = vsel %vm303, %v760, 0
      %772 = vmatprep.subr.mxu0 %v770
      %773 = vmatpush1.msra.mxu0 %v767
      %774 = vmatprep.subr.mxu0 0.0
      %775 = vmatpush1.msra.mxu0 0.0
      %776 = vmatprep.subr.mxu0 0.0
      %777 = vmatpush1.msra.mxu0 0.0
      %778 = vmatprep.subr.mxu0 0.0
      %779 = vmatpush1.msra.mxu0 0.0
      %780 = vmatprep.subr.mxu0 0.0
      %781 = vmatpush1.msra.mxu0 0.0
      %782 = vmatprep.subr.mxu0 0.0
      %783 = vmatpush1.msra.mxu0 0.0
      %784 = vmatprep.subr.mxu0 0.0
      %785 = vmatpush1.msra.mxu0 0.0
      %786 = vmatprep.subr.mxu0 0.0
      %787 = vmatpush1.msra.mxu0 0.0
      %788 = vmatprep.subr.mxu0 0.0
      %789 = vmatpush1.msra.mxu0 0.0
      %790 = vmatprep.subr.mxu0 0.0
      %791 = vmatpush1.msra.mxu0 0.0
      %792 = vmatprep.subr.mxu0 0.0
      %793 = vmatpush1.msra.mxu0 0.0
      %794 = vmatprep.subr.mxu0 0.0
      %795 = vmatpush1.msra.mxu0 0.0
      %796 = vmatprep.subr.mxu0 0.0
      %797 = vmatpush1.msra.mxu0 0.0
      %798 = vmatprep.subr.mxu0 0.0
      %799 = vmatpush1.msra.mxu0 0.0
      %800 = vmatprep.subr.mxu0 0.0
      %801 = vmatpush1.msra.mxu0 0.0
      %802 = vmatprep.subr.mxu0 0.0
      %803 = vmatpush1.msra.mxu0 0.0
      %804 = vmatprep.subr.mxu0 0.0
      %805 = vmatpush1.msra.mxu0 0.0
      %806 = vmatprep.subr.mxu0 0.0
      %807 = vmatpush1.msra.mxu0 0.0
      %808 = vmatprep.subr.mxu0 0.0
      %809 = vmatpush1.msra.mxu0 0.0
      %810 = vmatprep.subr.mxu0 0.0
      %811 = vmatpush1.msra.mxu0 0.0
      %812 = vmatprep.subr.mxu0 0.0
      %813 = vmatpush1.msra.mxu0 0.0
      %814 = vmatprep.subr.mxu0 0.0
      %815 = vmatpush1.msra.mxu0 0.0
      %816 = vmatprep.subr.mxu0 0.0
      %817 = vmatpush1.msra.mxu0 0.0
      %818 = vmatprep.subr.mxu0 0.0
      %819 = vmatpush1.msra.mxu0 0.0
      %820 = vmatprep.subr.mxu0 0.0
      %821 = vmatpush1.msra.mxu0 0.0
      %822 = vmatprep.subr.mxu0 0.0
      %823 = vmatpush1.msra.mxu0 0.0
      %824 = vmatprep.subr.mxu0 0.0
      %825 = vmatpush1.msra.mxu0 0.0
      %826 = vmatprep.subr.mxu0 0.0
      %827 = vmatpush1.msra.mxu0 0.0
      %828 = vmatprep.subr.mxu0 0.0
      %829 = vmatpush1.msra.mxu0 0.0
      %830 = vmatprep.subr.mxu0 0.0
      %831 = vmatpush1.msra.mxu0 0.0
      %832 = vmatprep.subr.mxu0 0.0
      %833 = vmatpush1.msra.mxu0 0.0
      %834 = vmatprep.subr.mxu0 0.0
      %835 = vmatpush1.msra.mxu0 0.0
      %836 = vmatprep.mubr.f32.mxu0 0.0
      %837 = vmatmul.mubr.f32.gmra.mrb[0].mxu0 %v764
      %v838 = vpop.f32.mrb[0].mxu0
      %v839 = vadd.f32 0.0, %v838
      %v840 = vpop.f32.mrb[0].mxu0
      %v841 = vadd.f32 0.0, %v840
      %842 = vdwg.mxu0
      %v843 = vadd.f32 %v748, %v839
      %v844 = vadd.f32 %v749, %v841
      %845 = vrot.lane.b32.xlu0 %v255, 113
      %v846 = vpop.permute.xlu0 %845
      %847 = vrot.lane.b32.xlu0 %v257, 113
      %v848 = vpop.permute.xlu0 %847
      %vm849 = vcmask 924672
      %v850 = vsel %vm849, %v846, %v848
      %v853 = vsel %vm849, %v848, 0.0
      %v854 = vmul.f32 %v850, %v281
      %v855 = vmul.f32 %v853, %v285
      %s856 = scalar_lea.vmem %s1, 48
      %v857 = vld [vmem:[%s856] sm:$0xff]
      %v859 = vsel %vm299, %v857, 0
      %v862 = vsel %vm303, %v854, 0
      %v865 = vsel %vm303, %v855, 0
      %867 = vmatprep.subr.mxu0 %v865
      %868 = vmatpush1.msra.mxu0 %v862
      %869 = vmatprep.subr.mxu0 0.0
      %870 = vmatpush1.msra.mxu0 0.0
      %871 = vmatprep.subr.mxu0 0.0
      %872 = vmatpush1.msra.mxu0 0.0
      %873 = vmatprep.subr.mxu0 0.0
      %874 = vmatpush1.msra.mxu0 0.0
      %875 = vmatprep.subr.mxu0 0.0
      %876 = vmatpush1.msra.mxu0 0.0
      %877 = vmatprep.subr.mxu0 0.0
      %878 = vmatpush1.msra.mxu0 0.0
      %879 = vmatprep.subr.mxu0 0.0
      %880 = vmatpush1.msra.mxu0 0.0
      %881 = vmatprep.subr.mxu0 0.0
      %882 = vmatpush1.msra.mxu0 0.0
      %883 = vmatprep.subr.mxu0 0.0
      %884 = vmatpush1.msra.mxu0 0.0
      %885 = vmatprep.subr.mxu0 0.0
      %886 = vmatpush1.msra.mxu0 0.0
      %887 = vmatprep.subr.mxu0 0.0
      %888 = vmatpush1.msra.mxu0 0.0
      %889 = vmatprep.subr.mxu0 0.0
      %890 = vmatpush1.msra.mxu0 0.0
      %891 = vmatprep.subr.mxu0 0.0
      %892 = vmatpush1.msra.mxu0 0.0
      %893 = vmatprep.subr.mxu0 0.0
      %894 = vmatpush1.msra.mxu0 0.0
      %895 = vmatprep.subr.mxu0 0.0
      %896 = vmatpush1.msra.mxu0 0.0
      %897 = vmatprep.subr.mxu0 0.0
      %898 = vmatpush1.msra.mxu0 0.0
      %899 = vmatprep.subr.mxu0 0.0
      %900 = vmatpush1.msra.mxu0 0.0
      %901 = vmatprep.subr.mxu0 0.0
      %902 = vmatpush1.msra.mxu0 0.0
      %903 = vmatprep.subr.mxu0 0.0
      %904 = vmatpush1.msra.mxu0 0.0
      %905 = vmatprep.subr.mxu0 0.0
      %906 = vmatpush1.msra.mxu0 0.0
      %907 = vmatprep.subr.mxu0 0.0
      %908 = vmatpush1.msra.mxu0 0.0
      %909 = vmatprep.subr.mxu0 0.0
      %910 = vmatpush1.msra.mxu0 0.0
      %911 = vmatprep.subr.mxu0 0.0
      %912 = vmatpush1.msra.mxu0 0.0
      %913 = vmatprep.subr.mxu0 0.0
      %914 = vmatpush1.msra.mxu0 0.0
      %915 = vmatprep.subr.mxu0 0.0
      %916 = vmatpush1.msra.mxu0 0.0
      %917 = vmatprep.subr.mxu0 0.0
      %918 = vmatpush1.msra.mxu0 0.0
      %919 = vmatprep.subr.mxu0 0.0
      %920 = vmatpush1.msra.mxu0 0.0
      %921 = vmatprep.subr.mxu0 0.0
      %922 = vmatpush1.msra.mxu0 0.0
      %923 = vmatprep.subr.mxu0 0.0
      %924 = vmatpush1.msra.mxu0 0.0
      %925 = vmatprep.subr.mxu0 0.0
      %926 = vmatpush1.msra.mxu0 0.0
      %927 = vmatprep.subr.mxu0 0.0
      %928 = vmatpush1.msra.mxu0 0.0
      %929 = vmatprep.subr.mxu0 0.0
      %930 = vmatpush1.msra.mxu0 0.0
      %931 = vmatprep.mubr.f32.mxu0 0.0
      %932 = vmatmul.mubr.f32.gmra.mrb[0].mxu0 %v859
      %v933 = vpop.f32.mrb[0].mxu0
      %v934 = vadd.f32 0.0, %v933
      %v935 = vpop.f32.mrb[0].mxu0
      %v936 = vadd.f32 0.0, %v935
      %937 = vdwg.mxu0
      %v938 = vadd.f32 %v843, %v934
      %v939 = vadd.f32 %v844, %v936
      %940 = vrot.lane.b32.xlu0 %v255, 112
      %v941 = vpop.permute.xlu0 %940
      %942 = vrot.lane.b32.xlu0 %v257, 112
      %v943 = vpop.permute.xlu0 %942
      %vm944 = vcmask 916480
      %v945 = vsel %vm944, %v941, %v943
      %v947 = vsel %vm944, %v943, 0.0
      %s948 = scalar_lea.vmem %s1, 56
      %v949 = vld [vmem:[%s948] sm:$0xff]
      %v951 = vsel %vm299, %v949, 0
      %v953 = vsel %vm303, %v945, 0
      %v956 = vsel %vm303, %v947, 0
      %958 = vmatprep.subr.mxu0 %v956
      %959 = vmatpush1.msra.mxu0 %v953
      %960 = vmatprep.subr.mxu0 0.0
      %961 = vmatpush1.msra.mxu0 0.0
      %962 = vmatprep.subr.mxu0 0.0
      %963 = vmatpush1.msra.mxu0 0.0
      %964 = vmatprep.subr.mxu0 0.0
      %965 = vmatpush1.msra.mxu0 0.0
      %966 = vmatprep.subr.mxu0 0.0
      %967 = vmatpush1.msra.mxu0 0.0
      %968 = vmatprep.subr.mxu0 0.0
      %969 = vmatpush1.msra.mxu0 0.0
      %970 = vmatprep.subr.mxu0 0.0
      %971 = vmatpush1.msra.mxu0 0.0
      %972 = vmatprep.subr.mxu0 0.0
      %973 = vmatpush1.msra.mxu0 0.0
      %974 = vmatprep.subr.mxu0 0.0
      %975 = vmatpush1.msra.mxu0 0.0
      %976 = vmatprep.subr.mxu0 0.0
      %977 = vmatpush1.msra.mxu0 0.0
      %978 = vmatprep.subr.mxu0 0.0
      %979 = vmatpush1.msra.mxu0 0.0
      %980 = vmatprep.subr.mxu0 0.0
      %981 = vmatpush1.msra.mxu0 0.0
      %982 = vmatprep.subr.mxu0 0.0
      %983 = vmatpush1.msra.mxu0 0.0
      %984 = vmatprep.subr.mxu0 0.0
      %985 = vmatpush1.msra.mxu0 0.0
      %986 = vmatprep.subr.mxu0 0.0
      %987 = vmatpush1.msra.mxu0 0.0
      %988 = vmatprep.subr.mxu0 0.0
      %989 = vmatpush1.msra.mxu0 0.0
      %990 = vmatprep.subr.mxu0 0.0
      %991 = vmatpush1.msra.mxu0 0.0
      %992 = vmatprep.subr.mxu0 0.0
      %993 = vmatpush1.msra.mxu0 0.0
      %994 = vmatprep.subr.mxu0 0.0
      %995 = vmatpush1.msra.mxu0 0.0
      %996 = vmatprep.subr.mxu0 0.0
      %997 = vmatpush1.msra.mxu0 0.0
      %998 = vmatprep.subr.mxu0 0.0
      %999 = vmatpush1.msra.mxu0 0.0
      %1000 = vmatprep.subr.mxu0 0.0
      %1001 = vmatpush1.msra.mxu0 0.0
      %1002 = vmatprep.subr.mxu0 0.0
      %1003 = vmatpush1.msra.mxu0 0.0
      %1004 = vmatprep.subr.mxu0 0.0
      %1005 = vmatpush1.msra.mxu0 0.0
      %1006 = vmatprep.subr.mxu0 0.0
      %1007 = vmatpush1.msra.mxu0 0.0
      %1008 = vmatprep.subr.mxu0 0.0
      %1009 = vmatpush1.msra.mxu0 0.0
      %1010 = vmatprep.subr.mxu0 0.0
      %1011 = vmatpush1.msra.mxu0 0.0
      %1012 = vmatprep.subr.mxu0 0.0
      %1013 = vmatpush1.msra.mxu0 0.0
      %1014 = vmatprep.subr.mxu0 0.0
      %1015 = vmatpush1.msra.mxu0 0.0
      %1016 = vmatprep.subr.mxu0 0.0
      %1017 = vmatpush1.msra.mxu0 0.0
      %1018 = vmatprep.subr.mxu0 0.0
      %1019 = vmatpush1.msra.mxu0 0.0
      %1020 = vmatprep.subr.mxu0 0.0
      %1021 = vmatpush1.msra.mxu0 0.0
      %1022 = vmatprep.mubr.f32.mxu0 0.0
      %1023 = vmatmul.mubr.f32.gmra.mrb[0].mxu0 %v951
      %v1024 = vpop.f32.mrb[0].mxu0
      %v1025 = vadd.f32 0.0, %v1024
      %v1026 = vpop.f32.mrb[0].mxu0
      %v1027 = vadd.f32 0.0, %v1026
      %1028 = vdwg.mxu0
      %v1029 = vadd.f32 %v938, %v1025
      %v1030 = vadd.f32 %v939, %v1027
      %1031 = vrot.lane.b32.xlu0 %v255, 111
      %v1032 = vpop.permute.xlu0 %1031
      %1033 = vrot.lane.b32.xlu0 %v257, 111
      %v1034 = vpop.permute.xlu0 %1033
      %vm1035 = vcmask 908288
      %v1036 = vsel %vm1035, %v1032, %v1034
      %v1039 = vsel %vm1035, %v1034, 0.0
      %v1040 = vmul.f32 %v1036, %v482
      %v1041 = vmul.f32 %v1039, %v486
      %s1042 = scalar_lea.vmem %s1, 64
      %v1043 = vld [vmem:[%s1042] sm:$0xff]
      %v1045 = vsel %vm299, %v1043, 0
      %v1048 = vsel %vm303, %v1040, 0
      %v1051 = vsel %vm303, %v1041, 0
      %1053 = vmatprep.subr.mxu0 %v1051
      %1054 = vmatpush1.msra.mxu0 %v1048
      %1055 = vmatprep.subr.mxu0 0.0
      %1056 = vmatpush1.msra.mxu0 0.0
      %1057 = vmatprep.subr.mxu0 0.0
      %1058 = vmatpush1.msra.mxu0 0.0
      %1059 = vmatprep.subr.mxu0 0.0
      %1060 = vmatpush1.msra.mxu0 0.0
      %1061 = vmatprep.subr.mxu0 0.0
      %1062 = vmatpush1.msra.mxu0 0.0
      %1063 = vmatprep.subr.mxu0 0.0
      %1064 = vmatpush1.msra.mxu0 0.0
      %1065 = vmatprep.subr.mxu0 0.0
      %1066 = vmatpush1.msra.mxu0 0.0
      %1067 = vmatprep.subr.mxu0 0.0
      %1068 = vmatpush1.msra.mxu0 0.0
      %1069 = vmatprep.subr.mxu0 0.0
      %1070 = vmatpush1.msra.mxu0 0.0
      %1071 = vmatprep.subr.mxu0 0.0
      %1072 = vmatpush1.msra.mxu0 0.0
      %1073 = vmatprep.subr.mxu0 0.0
      %1074 = vmatpush1.msra.mxu0 0.0
      %1075 = vmatprep.subr.mxu0 0.0
      %1076 = vmatpush1.msra.mxu0 0.0
      %1077 = vmatprep.subr.mxu0 0.0
      %1078 = vmatpush1.msra.mxu0 0.0
      %1079 = vmatprep.subr.mxu0 0.0
      %1080 = vmatpush1.msra.mxu0 0.0
      %1081 = vmatprep.subr.mxu0 0.0
      %1082 = vmatpush1.msra.mxu0 0.0
      %1083 = vmatprep.subr.mxu0 0.0
      %1084 = vmatpush1.msra.mxu0 0.0
      %1085 = vmatprep.subr.mxu0 0.0
      %1086 = vmatpush1.msra.mxu0 0.0
      %1087 = vmatprep.subr.mxu0 0.0
      %1088 = vmatpush1.msra.mxu0 0.0
      %1089 = vmatprep.subr.mxu0 0.0
      %1090 = vmatpush1.msra.mxu0 0.0
      %1091 = vmatprep.subr.mxu0 0.0
      %1092 = vmatpush1.msra.mxu0 0.0
      %1093 = vmatprep.subr.mxu0 0.0
      %1094 = vmatpush1.msra.mxu0 0.0
      %1095 = vmatprep.subr.mxu0 0.0
      %1096 = vmatpush1.msra.mxu0 0.0
      %1097 = vmatprep.subr.mxu0 0.0
      %1098 = vmatpush1.msra.mxu0 0.0
      %1099 = vmatprep.subr.mxu0 0.0
      %1100 = vmatpush1.msra.mxu0 0.0
      %1101 = vmatprep.subr.mxu0 0.0
      %1102 = vmatpush1.msra.mxu0 0.0
      %1103 = vmatprep.subr.mxu0 0.0
      %1104 = vmatpush1.msra.mxu0 0.0
      %1105 = vmatprep.subr.mxu0 0.0
      %1106 = vmatpush1.msra.mxu0 0.0
      %1107 = vmatprep.subr.mxu0 0.0
      %1108 = vmatpush1.msra.mxu0 0.0
      %1109 = vmatprep.subr.mxu0 0.0
      %1110 = vmatpush1.msra.mxu0 0.0
      %1111 = vmatprep.subr.mxu0 0.0
      %1112 = vmatpush1.msra.mxu0 0.0
      %1113 = vmatprep.subr.mxu0 0.0
      %1114 = vmatpush1.msra.mxu0 0.0
      %1115 = vmatprep.subr.mxu0 0.0
      %1116 = vmatpush1.msra.mxu0 0.0
      %1117 = vmatprep.mubr.f32.mxu0 0.0
      %1118 = vmatmul.mubr.f32.gmra.mrb[0].mxu0 %v1045
      %v1119 = vpop.f32.mrb[0].mxu0
      %v1120 = vadd.f32 0.0, %v1119
      %v1121 = vpop.f32.mrb[0].mxu0
      %v1122 = vadd.f32 0.0, %v1121
      %1123 = vdwg.mxu0
      %v1124 = vadd.f32 %v1029, %v1120
      %v1125 = vadd.f32 %v1030, %v1122
      %v1126 = vld [vmem:[%s2] sm:$0xff]
      %1128 = vset.pattern.permute.xlu0 0
      %1129 = vperm.xlu0 %1128, %v1126
      %v1130 = vpop.permute.xlu0 %1129
      %v1132 = vadd.f32 %v1124, %v1130
      %v1133 = vadd.f32 %v1125, %v1130
      %v1134 = vmax.f32 %v1132, 0.0
      %v1135 = vmax.f32 %v1133, 0.0
      %v1136 = vpack.c.bf16 %v1134, %v1134
      %v1137 = vpack.c.bf16 %v1135, %v1135
      %1140 = vrot.lane.b32.xlu0 %v1136, 17
      %v1141 = vpop.permute.xlu0 %1140
      %1142 = vrot.lane.b32.xlu0 %v1137, 17
      %v1143 = vpop.permute.xlu0 %1142
      %vm1144 = vcmask 138240
      %v1145 = vsel %vm1144, %v1141, %v1143
      %v1149 = vsel %vm262, 0, %v1141
      %v1153 = vunpack.c.l.s4 1966171168
      %v1154 = vunpack.c.0.s8 %v1153
      %v1155 = vlaneseq
      %v1156 = vshrl.u32 %v1155, 7
      %v1157 = vsub.s32 %v1154, %v1156
      %v1158 = vrot.slane %v253, %v1157
      %v1159 = vcombine.high %v1158, %v1158
      %v1161 = vunpack.c.l.s4 1966171168
      %v1162 = vunpack.c.0.s8 %v1161
      %v1163 = vlaneseq
      %v1164 = vshrl.u32 %v1163, 7
      %v1165 = vsub.s32 %v1162, %v1164
      %v1166 = vrot.slane %v1158, %v1165
      %v1168 = vunpack.c.l.s4 1966171168
      %v1169 = vunpack.c.0.s8 %v1168
      %v1170 = vlaneseq
      %v1171 = vshrl.u32 %v1170, 7
      %v1172 = vsub.s32 %v1169, %v1171
      %v1173 = vrot.slane %v1159, %v1172
      %v1175 = vpack.i.b16 %v1166, %v1166
      %v1177 = vlaneseq
      %v1178 = vshrl.u32 %v1177, 7
      %v1179 = vsub.s32 0, %v1178
      %v1180 = vrot.slane %v1175, %v1179
      %v1182 = vpack.i.b16 %v1173, %v1173
      %v1184 = vlaneseq
      %v1185 = vshrl.u32 %v1184, 7
      %v1186 = vsub.s32 0, %v1185
      %v1187 = vrot.slane %v1182, %v1186
      %v1188 = vmul.bf16 %v1149, %v1180
      %v1189 = vmul.bf16 %v1145, %v1187
      %v1190 = vld [vmem:[%s3] sm:$0xf]
      %1191 = vrot.lane.b32.xlu0 %v1136, 16
      %v1192 = vpop.permute.xlu0 %1191
      %1193 = vrot.lane.b32.xlu0 %v1137, 16
      %v1194 = vpop.permute.xlu0 %1193
      %vm1195 = vcmask 130048
      %v1196 = vsel %vm1195, %v1192, %v1194
      %v1198 = vsel %vm293, 0, %v1192
      %s1199 = scalar_lea.vmem %s3, 4
      %v1200 = vld [vmem:[%s1199] sm:$0xf]
      %vm1201 = vcmask 64512
      %v1203 = vsel %vm1201, %v1200, 0
      %v1205 = vsel %vm303, %v1198, 0
      %v1208 = vsel %vm303, %v1196, 0
      %1210 = vmatprep.subr.bf16.mxu0 %v1208
      %1211 = vmatpush1.bf16.msra.mxu0 %v1205
      %1212 = vmatprep.subr.bf16.mxu0 0
      %1213 = vmatpush1.bf16.msra.mxu0 0
      %1214 = vmatprep.subr.bf16.mxu0 0
      %1215 = vmatpush1.bf16.msra.mxu0 0
      %1216 = vmatprep.subr.bf16.mxu0 0
      %1217 = vmatpush1.bf16.msra.mxu0 0
      %1218 = vmatprep.subr.bf16.mxu0 0
      %1219 = vmatpush1.bf16.msra.mxu0 0
      %1220 = vmatprep.subr.bf16.mxu0 0
      %1221 = vmatpush1.bf16.msra.mxu0 0
      %1222 = vmatprep.subr.bf16.mxu0 0
      %1223 = vmatpush1.bf16.msra.mxu0 0
      %1224 = vmatprep.subr.bf16.mxu0 0
      %1225 = vmatpush1.bf16.msra.mxu0 0
      %1226 = vmatprep.subr.bf16.mxu0 0
      %1227 = vmatpush1.bf16.msra.mxu0 0
      %1228 = vmatprep.subr.bf16.mxu0 0
      %1229 = vmatpush1.bf16.msra.mxu0 0
      %1230 = vmatprep.subr.bf16.mxu0 0
      %1231 = vmatpush1.bf16.msra.mxu0 0
      %1232 = vmatprep.subr.bf16.mxu0 0
      %1233 = vmatpush1.bf16.msra.mxu0 0
      %1234 = vmatprep.subr.bf16.mxu0 0
      %1235 = vmatpush1.bf16.msra.mxu0 0
      %1236 = vmatprep.subr.bf16.mxu0 0
      %1237 = vmatpush1.bf16.msra.mxu0 0
      %1238 = vmatprep.subr.bf16.mxu0 0
      %1239 = vmatpush1.bf16.msra.mxu0 0
      %1240 = vmatprep.subr.bf16.mxu0 0
      %1241 = vmatpush1.bf16.msra.mxu0 0
      %1242 = vmatprep.mubr.bf16.mxu0 0
      %1243 = vmatmul.mubr.bf16.gmra.mrb[0].mxu0 %v1203
      %v1244 = vpop.f32.mrb[0].mxu0
      %v1245 = vadd.f32 0.0, %v1244
      %v1246 = vpop.f32.mrb[0].mxu0
      %v1247 = vadd.f32 0.0, %v1246
      %v1248 = vpop.f32.mrb[0].mxu0
      %v1249 = vpop.f32.mrb[0].mxu0
      %1250 = vdwg.mxu0
      %v1252 = vsel %vm1201, %v1190, 0
      %v1255 = vsel %vm303, %v1188, 0
      %v1258 = vsel %vm303, %v1189, 0
      %1260 = vmatprep.subr.bf16.mxu0 %v1258
      %1261 = vmatpush1.bf16.msra.mxu0 %v1255
      %1262 = vmatprep.subr.bf16.mxu0 0
      %1263 = vmatpush1.bf16.msra.mxu0 0
      %1264 = vmatprep.subr.bf16.mxu0 0
      %1265 = vmatpush1.bf16.msra.mxu0 0
      %1266 = vmatprep.subr.bf16.mxu0 0
      %1267 = vmatpush1.bf16.msra.mxu0 0
      %1268 = vmatprep.subr.bf16.mxu0 0
      %1269 = vmatpush1.bf16.msra.mxu0 0
      %1270 = vmatprep.subr.bf16.mxu0 0
      %1271 = vmatpush1.bf16.msra.mxu0 0
      %1272 = vmatprep.subr.bf16.mxu0 0
      %1273 = vmatpush1.bf16.msra.mxu0 0
      %1274 = vmatprep.subr.bf16.mxu0 0
      %1275 = vmatpush1.bf16.msra.mxu0 0
      %1276 = vmatprep.subr.bf16.mxu0 0
      %1277 = vmatpush1.bf16.msra.mxu0 0
      %1278 = vmatprep.subr.bf16.mxu0 0
      %1279 = vmatpush1.bf16.msra.mxu0 0
      %1280 = vmatprep.subr.bf16.mxu0 0
      %1281 = vmatpush1.bf16.msra.mxu0 0
      %1282 = vmatprep.subr.bf16.mxu0 0
      %1283 = vmatpush1.bf16.msra.mxu0 0
      %1284 = vmatprep.subr.bf16.mxu0 0
      %1285 = vmatpush1.bf16.msra.mxu0 0
      %1286 = vmatprep.subr.bf16.mxu0 0
      %1287 = vmatpush1.bf16.msra.mxu0 0
      %1288 = vmatprep.subr.bf16.mxu0 0
      %1289 = vmatpush1.bf16.msra.mxu0 0
      %1290 = vmatprep.subr.bf16.mxu0 0
      %1291 = vmatpush1.bf16.msra.mxu0 0
      %1292 = vmatprep.mubr.bf16.mxu0 0
      %1293 = vmatmul.mubr.bf16.gmra.mrb[0].mxu0 %v1252
      %v1294 = vpop.f32.mrb[0].mxu0
      %v1295 = vadd.f32 %v1245, %v1294
      %v1296 = vpop.f32.mrb[0].mxu0
      %v1297 = vadd.f32 %v1247, %v1296
      %v1298 = vpop.f32.mrb[0].mxu0
      %v1299 = vpop.f32.mrb[0].mxu0
      %1300 = vdwg.mxu0
      %1301 = vrot.lane.b32.xlu0 %v1136, 15
      %v1302 = vpop.permute.xlu0 %1301
      %1303 = vrot.lane.b32.xlu0 %v1137, 15
      %v1304 = vpop.permute.xlu0 %1303
      %vm1305 = vcmask 121856
      %v1306 = vsel %vm1305, %v1302, %v1304
      %v1309 = vsel %vm464, 0, %v1302
      %v1311 = vshrl.u32 %v1166, 16
      %v1312 = vpack.i.b16 %v1311, %v1311
      %v1314 = vlaneseq
      %v1315 = vshrl.u32 %v1314, 7
      %v1316 = vsub.s32 0, %v1315
      %v1317 = vrot.slane %v1312, %v1316
      %v1318 = vshrl.u32 %v1173, 16
      %v1319 = vpack.i.b16 %v1318, %v1318
      %v1321 = vlaneseq
      %v1322 = vshrl.u32 %v1321, 7
      %v1323 = vsub.s32 0, %v1322
      %v1324 = vrot.slane %v1319, %v1323
      %v1325 = vmul.bf16 %v1309, %v1317
      %v1326 = vmul.bf16 %v1306, %v1324
      %s1327 = scalar_lea.vmem %s3, 8
      %v1328 = vld [vmem:[%s1327] sm:$0xf]
      %v1330 = vsel %vm1201, %v1328, 0
      %v1333 = vsel %vm303, %v1325, 0
      %v1336 = vsel %vm303, %v1326, 0
      %1338 = vmatprep.subr.bf16.mxu0 %v1336
      %1339 = vmatpush1.bf16.msra.mxu0 %v1333
      %1340 = vmatprep.subr.bf16.mxu0 0
      %1341 = vmatpush1.bf16.msra.mxu0 0
      %1342 = vmatprep.subr.bf16.mxu0 0
      %1343 = vmatpush1.bf16.msra.mxu0 0
      %1344 = vmatprep.subr.bf16.mxu0 0
      %1345 = vmatpush1.bf16.msra.mxu0 0
      %1346 = vmatprep.subr.bf16.mxu0 0
      %1347 = vmatpush1.bf16.msra.mxu0 0
      %1348 = vmatprep.subr.bf16.mxu0 0
      %1349 = vmatpush1.bf16.msra.mxu0 0
      %1350 = vmatprep.subr.bf16.mxu0 0
      %1351 = vmatpush1.bf16.msra.mxu0 0
      %1352 = vmatprep.subr.bf16.mxu0 0
      %1353 = vmatpush1.bf16.msra.mxu0 0
      %1354 = vmatprep.subr.bf16.mxu0 0
      %1355 = vmatpush1.bf16.msra.mxu0 0
      %1356 = vmatprep.subr.bf16.mxu0 0
      %1357 = vmatpush1.bf16.msra.mxu0 0
      %1358 = vmatprep.subr.bf16.mxu0 0
      %1359 = vmatpush1.bf16.msra.mxu0 0
      %1360 = vmatprep.subr.bf16.mxu0 0
      %1361 = vmatpush1.bf16.msra.mxu0 0
      %1362 = vmatprep.subr.bf16.mxu0 0
      %1363 = vmatpush1.bf16.msra.mxu0 0
      %1364 = vmatprep.subr.bf16.mxu0 0
      %1365 = vmatpush1.bf16.msra.mxu0 0
      %1366 = vmatprep.subr.bf16.mxu0 0
      %1367 = vmatpush1.bf16.msra.mxu0 0
      %1368 = vmatprep.subr.bf16.mxu0 0
      %1369 = vmatpush1.bf16.msra.mxu0 0
      %1370 = vmatprep.mubr.bf16.mxu0 0
      %1371 = vmatmul.mubr.bf16.gmra.mrb[0].mxu0 %v1330
      %v1372 = vpop.f32.mrb[0].mxu0
      %v1373 = vadd.f32 0.0, %v1372
      %v1374 = vpop.f32.mrb[0].mxu0
      %v1375 = vadd.f32 0.0, %v1374
      %v1376 = vpop.f32.mrb[0].mxu0
      %v1377 = vpop.f32.mrb[0].mxu0
      %1378 = vdwg.mxu0
      %v1379 = vadd.f32 %v1295, %v1373
      %v1380 = vadd.f32 %v1297, %v1375
      %1381 = vrot.lane.b32.xlu0 %v1136, 1
      %v1382 = vpop.permute.xlu0 %1381
      %1383 = vrot.lane.b32.xlu0 %v1137, 1
      %v1384 = vpop.permute.xlu0 %1383
      %vm1385 = vcmask 7168
      %v1386 = vsel %vm1385, %v1382, %v1384
      %v1389 = vsel %vm577, 0, %v1382
      %v1391 = vmul.bf16 %v1389, %v1180
      %v1392 = vmul.bf16 %v1386, %v1187
      %s1393 = scalar_lea.vmem %s3, 12
      %v1394 = vld [vmem:[%s1393] sm:$0xf]
      %v1396 = vsel %vm1201, %v1394, 0
      %v1399 = vsel %vm303, %v1391, 0
      %v1402 = vsel %vm303, %v1392, 0
      %1404 = vmatprep.subr.bf16.mxu0 %v1402
      %1405 = vmatpush1.bf16.msra.mxu0 %v1399
      %1406 = vmatprep.subr.bf16.mxu0 0
      %1407 = vmatpush1.bf16.msra.mxu0 0
      %1408 = vmatprep.subr.bf16.mxu0 0
      %1409 = vmatpush1.bf16.msra.mxu0 0
      %1410 = vmatprep.subr.bf16.mxu0 0
      %1411 = vmatpush1.bf16.msra.mxu0 0
      %1412 = vmatprep.subr.bf16.mxu0 0
      %1413 = vmatpush1.bf16.msra.mxu0 0
      %1414 = vmatprep.subr.bf16.mxu0 0
      %1415 = vmatpush1.bf16.msra.mxu0 0
      %1416 = vmatprep.subr.bf16.mxu0 0
      %1417 = vmatpush1.bf16.msra.mxu0 0
      %1418 = vmatprep.subr.bf16.mxu0 0
      %1419 = vmatpush1.bf16.msra.mxu0 0
      %1420 = vmatprep.subr.bf16.mxu0 0
      %1421 = vmatpush1.bf16.msra.mxu0 0
      %1422 = vmatprep.subr.bf16.mxu0 0
      %1423 = vmatpush1.bf16.msra.mxu0 0
      %1424 = vmatprep.subr.bf16.mxu0 0
      %1425 = vmatpush1.bf16.msra.mxu0 0
      %1426 = vmatprep.subr.bf16.mxu0 0
      %1427 = vmatpush1.bf16.msra.mxu0 0
      %1428 = vmatprep.subr.bf16.mxu0 0
      %1429 = vmatpush1.bf16.msra.mxu0 0
      %1430 = vmatprep.subr.bf16.mxu0 0
      %1431 = vmatpush1.bf16.msra.mxu0 0
      %1432 = vmatprep.subr.bf16.mxu0 0
      %1433 = vmatpush1.bf16.msra.mxu0 0
      %1434 = vmatprep.subr.bf16.mxu0 0
      %1435 = vmatpush1.bf16.msra.mxu0 0
      %1436 = vmatprep.mubr.bf16.mxu0 0
      %1437 = vmatmul.mubr.bf16.gmra.mrb[0].mxu0 %v1396
      %v1438 = vpop.f32.mrb[0].mxu0
      %v1439 = vadd.f32 0.0, %v1438
      %v1440 = vpop.f32.mrb[0].mxu0
      %v1441 = vadd.f32 0.0, %v1440
      %v1442 = vpop.f32.mrb[0].mxu0
      %v1443 = vpop.f32.mrb[0].mxu0
      %1444 = vdwg.mxu0
      %v1445 = vadd.f32 %v1379, %v1439
      %v1446 = vadd.f32 %v1380, %v1441
      %s1447 = scalar_lea.vmem %s3, 16
      %v1448 = vld [vmem:[%s1447] sm:$0xf]
      %v1450 = vsel %vm1201, %v1448, 0
      %v1453 = vsel %vm303, %v1136, 0
      %v1456 = vsel %vm303, %v1137, 0
      %1458 = vmatprep.subr.bf16.mxu0 %v1456
      %1459 = vmatpush1.bf16.msra.mxu0 %v1453
      %1460 = vmatprep.subr.bf16.mxu0 0
      %1461 = vmatpush1.bf16.msra.mxu0 0
      %1462 = vmatprep.subr.bf16.mxu0 0
      %1463 = vmatpush1.bf16.msra.mxu0 0
      %1464 = vmatprep.subr.bf16.mxu0 0
      %1465 = vmatpush1.bf16.msra.mxu0 0
      %1466 = vmatprep.subr.bf16.mxu0 0
      %1467 = vmatpush1.bf16.msra.mxu0 0
      %1468 = vmatprep.subr.bf16.mxu0 0
      %1469 = vmatpush1.bf16.msra.mxu0 0
      %1470 = vmatprep.subr.bf16.mxu0 0
      %1471 = vmatpush1.bf16.msra.mxu0 0
      %1472 = vmatprep.subr.bf16.mxu0 0
      %1473 = vmatpush1.bf16.msra.mxu0 0
      %1474 = vmatprep.subr.bf16.mxu0 0
      %1475 = vmatpush1.bf16.msra.mxu0 0
      %1476 = vmatprep.subr.bf16.mxu0 0
      %1477 = vmatpush1.bf16.msra.mxu0 0
      %1478 = vmatprep.subr.bf16.mxu0 0
      %1479 = vmatpush1.bf16.msra.mxu0 0
      %1480 = vmatprep.subr.bf16.mxu0 0
      %1481 = vmatpush1.bf16.msra.mxu0 0
      %1482 = vmatprep.subr.bf16.mxu0 0
      %1483 = vmatpush1.bf16.msra.mxu0 0
      %1484 = vmatprep.subr.bf16.mxu0 0
      %1485 = vmatpush1.bf16.msra.mxu0 0
      %1486 = vmatprep.subr.bf16.mxu0 0
      %1487 = vmatpush1.bf16.msra.mxu0 0
      %1488 = vmatprep.subr.bf16.mxu0 0
      %1489 = vmatpush1.bf16.msra.mxu0 0
      %1490 = vmatprep.mubr.bf16.mxu0 0
      %1491 = vmatmul.mubr.bf16.gmra.mrb[0].mxu0 %v1450
      %v1492 = vpop.f32.mrb[0].mxu0
      %v1493 = vadd.f32 0.0, %v1492
      %v1494 = vpop.f32.mrb[0].mxu0
      %v1495 = vadd.f32 0.0, %v1494
      %v1496 = vpop.f32.mrb[0].mxu0
      %v1497 = vpop.f32.mrb[0].mxu0
      %1498 = vdwg.mxu0
      %v1499 = vadd.f32 %v1445, %v1493
      %v1500 = vadd.f32 %v1446, %v1495
      %1501 = vrot.lane.b32.xlu0 %v1136, 127
      %v1502 = vpop.permute.xlu0 %1501
      %1503 = vrot.lane.b32.xlu0 %v1137, 127
      %v1504 = vpop.permute.xlu0 %1503
      %vm1505 = vcmask 1039360
      %v1506 = vsel %vm1505, %v1502, %v1504
      %v1509 = vsel %vm754, %v1504, 0
      %v1511 = vmul.bf16 %v1506, %v1317
      %v1512 = vmul.bf16 %v1509, %v1324
      %s1513 = scalar_lea.vmem %s3, 20
      %v1514 = vld [vmem:[%s1513] sm:$0xf]
      %v1516 = vsel %vm1201, %v1514, 0
      %v1519 = vsel %vm303, %v1511, 0
      %v1522 = vsel %vm303, %v1512, 0
      %1524 = vmatprep.subr.bf16.mxu0 %v1522
      %1525 = vmatpush1.bf16.msra.mxu0 %v1519
      %1526 = vmatprep.subr.bf16.mxu0 0
      %1527 = vmatpush1.bf16.msra.mxu0 0
      %1528 = vmatprep.subr.bf16.mxu0 0
      %1529 = vmatpush1.bf16.msra.mxu0 0
      %1530 = vmatprep.subr.bf16.mxu0 0
      %1531 = vmatpush1.bf16.msra.mxu0 0
      %1532 = vmatprep.subr.bf16.mxu0 0
      %1533 = vmatpush1.bf16.msra.mxu0 0
      %1534 = vmatprep.subr.bf16.mxu0 0
      %1535 = vmatpush1.bf16.msra.mxu0 0
      %1536 = vmatprep.subr.bf16.mxu0 0
      %1537 = vmatpush1.bf16.msra.mxu0 0
      %1538 = vmatprep.subr.bf16.mxu0 0
      %1539 = vmatpush1.bf16.msra.mxu0 0
      %1540 = vmatprep.subr.bf16.mxu0 0
      %1541 = vmatpush1.bf16.msra.mxu0 0
      %1542 = vmatprep.subr.bf16.mxu0 0
      %1543 = vmatpush1.bf16.msra.mxu0 0
      %1544 = vmatprep.subr.bf16.mxu0 0
      %1545 = vmatpush1.bf16.msra.mxu0 0
      %1546 = vmatprep.subr.bf16.mxu0 0
      %1547 = vmatpush1.bf16.msra.mxu0 0
      %1548 = vmatprep.subr.bf16.mxu0 0
      %1549 = vmatpush1.bf16.msra.mxu0 0
      %1550 = vmatprep.subr.bf16.mxu0 0
      %1551 = vmatpush1.bf16.msra.mxu0 0
      %1552 = vmatprep.subr.bf16.mxu0 0
      %1553 = vmatpush1.bf16.msra.mxu0 0
      %1554 = vmatprep.subr.bf16.mxu0 0
      %1555 = vmatpush1.bf16.msra.mxu0 0
      %1556 = vmatprep.mubr.bf16.mxu0 0
      %1557 = vmatmul.mubr.bf16.gmra.mrb[0].mxu0 %v1516
      %v1558 = vpop.f32.mrb[0].mxu0
      %v1559 = vadd.f32 0.0, %v1558
      %v1560 = vpop.f32.mrb[0].mxu0
      %v1561 = vadd.f32 0.0, %v1560
      %v1562 = vpop.f32.mrb[0].mxu0
      %v1563 = vpop.f32.mrb[0].mxu0
      %1564 = vdwg.mxu0
      %v1565 = vadd.f32 %v1499, %v1559
      %v1566 = vadd.f32 %v1500, %v1561
      %1567 = vrot.lane.b32.xlu0 %v1136, 113
      %v1568 = vpop.permute.xlu0 %1567
      %1569 = vrot.lane.b32.xlu0 %v1137, 113
      %v1570 = vpop.permute.xlu0 %1569
      %vm1571 = vcmask 924672
      %v1572 = vsel %vm1571, %v1568, %v1570
      %v1575 = vsel %vm849, %v1570, 0
      %v1577 = vmul.bf16 %v1572, %v1180
      %v1578 = vmul.bf16 %v1575, %v1187
      %s1579 = scalar_lea.vmem %s3, 24
      %v1580 = vld [vmem:[%s1579] sm:$0xf]
      %v1582 = vsel %vm1201, %v1580, 0
      %v1585 = vsel %vm303, %v1577, 0
      %v1588 = vsel %vm303, %v1578, 0
      %1590 = vmatprep.subr.bf16.mxu0 %v1588
      %1591 = vmatpush1.bf16.msra.mxu0 %v1585
      %1592 = vmatprep.subr.bf16.mxu0 0
      %1593 = vmatpush1.bf16.msra.mxu0 0
      %1594 = vmatprep.subr.bf16.mxu0 0
      %1595 = vmatpush1.bf16.msra.mxu0 0
      %1596 = vmatprep.subr.bf16.mxu0 0
      %1597 = vmatpush1.bf16.msra.mxu0 0
      %1598 = vmatprep.subr.bf16.mxu0 0
      %1599 = vmatpush1.bf16.msra.mxu0 0
      %1600 = vmatprep.subr.bf16.mxu0 0
      %1601 = vmatpush1.bf16.msra.mxu0 0
      %1602 = vmatprep.subr.bf16.mxu0 0
      %1603 = vmatpush1.bf16.msra.mxu0 0
      %1604 = vmatprep.subr.bf16.mxu0 0
      %1605 = vmatpush1.bf16.msra.mxu0 0
      %1606 = vmatprep.subr.bf16.mxu0 0
      %1607 = vmatpush1.bf16.msra.mxu0 0
      %1608 = vmatprep.subr.bf16.mxu0 0
      %1609 = vmatpush1.bf16.msra.mxu0 0
      %1610 = vmatprep.subr.bf16.mxu0 0
      %1611 = vmatpush1.bf16.msra.mxu0 0
      %1612 = vmatprep.subr.bf16.mxu0 0
      %1613 = vmatpush1.bf16.msra.mxu0 0
      %1614 = vmatprep.subr.bf16.mxu0 0
      %1615 = vmatpush1.bf16.msra.mxu0 0
      %1616 = vmatprep.subr.bf16.mxu0 0
      %1617 = vmatpush1.bf16.msra.mxu0 0
      %1618 = vmatprep.subr.bf16.mxu0 0
      %1619 = vmatpush1.bf16.msra.mxu0 0
      %1620 = vmatprep.subr.bf16.mxu0 0
      %1621 = vmatpush1.bf16.msra.mxu0 0
      %1622 = vmatprep.mubr.bf16.mxu0 0
      %1623 = vmatmul.mubr.bf16.gmra.mrb[0].mxu0 %v1582
      %v1624 = vpop.f32.mrb[0].mxu0
      %v1625 = vadd.f32 0.0, %v1624
      %v1626 = vpop.f32.mrb[0].mxu0
      %v1627 = vadd.f32 0.0, %v1626
      %v1628 = vpop.f32.mrb[0].mxu0
      %v1629 = vpop.f32.mrb[0].mxu0
      %1630 = vdwg.mxu0
      %v1631 = vadd.f32 %v1565, %v1625
      %v1632 = vadd.f32 %v1566, %v1627
      %1633 = vrot.lane.b32.xlu0 %v1136, 112
      %v1634 = vpop.permute.xlu0 %1633
      %1635 = vrot.lane.b32.xlu0 %v1137, 112
      %v1636 = vpop.permute.xlu0 %1635
      %vm1637 = vcmask 916480
      %v1638 = vsel %vm1637, %v1634, %v1636
      %v1640 = vsel %vm944, %v1636, 0
      %s1641 = scalar_lea.vmem %s3, 28
      %v1642 = vld [vmem:[%s1641] sm:$0xf]
      %v1644 = vsel %vm1201, %v1642, 0
      %v1647 = vsel %vm303, %v1638, 0
      %v1649 = vsel %vm303, %v1640, 0
      %1651 = vmatprep.subr.bf16.mxu0 %v1649
      %1652 = vmatpush1.bf16.msra.mxu0 %v1647
      %1653 = vmatprep.subr.bf16.mxu0 0
      %1654 = vmatpush1.bf16.msra.mxu0 0
      %1655 = vmatprep.subr.bf16.mxu0 0
      %1656 = vmatpush1.bf16.msra.mxu0 0
      %1657 = vmatprep.subr.bf16.mxu0 0
      %1658 = vmatpush1.bf16.msra.mxu0 0
      %1659 = vmatprep.subr.bf16.mxu0 0
      %1660 = vmatpush1.bf16.msra.mxu0 0
      %1661 = vmatprep.subr.bf16.mxu0 0
      %1662 = vmatpush1.bf16.msra.mxu0 0
      %1663 = vmatprep.subr.bf16.mxu0 0
      %1664 = vmatpush1.bf16.msra.mxu0 0
      %1665 = vmatprep.subr.bf16.mxu0 0
      %1666 = vmatpush1.bf16.msra.mxu0 0
      %1667 = vmatprep.subr.bf16.mxu0 0
      %1668 = vmatpush1.bf16.msra.mxu0 0
      %1669 = vmatprep.subr.bf16.mxu0 0
      %1670 = vmatpush1.bf16.msra.mxu0 0
      %1671 = vmatprep.subr.bf16.mxu0 0
      %1672 = vmatpush1.bf16.msra.mxu0 0
      %1673 = vmatprep.subr.bf16.mxu0 0
      %1674 = vmatpush1.bf16.msra.mxu0 0
      %1675 = vmatprep.subr.bf16.mxu0 0
      %1676 = vmatpush1.bf16.msra.mxu0 0
      %1677 = vmatprep.subr.bf16.mxu0 0
      %1678 = vmatpush1.bf16.msra.mxu0 0
      %1679 = vmatprep.subr.bf16.mxu0 0
      %1680 = vmatpush1.bf16.msra.mxu0 0
      %1681 = vmatprep.subr.bf16.mxu0 0
      %1682 = vmatpush1.bf16.msra.mxu0 0
      %1683 = vmatprep.mubr.bf16.mxu0 0
      %1684 = vmatmul.mubr.bf16.gmra.mrb[0].mxu0 %v1644
      %v1685 = vpop.f32.mrb[0].mxu0
      %v1686 = vadd.f32 0.0, %v1685
      %v1687 = vpop.f32.mrb[0].mxu0
      %v1688 = vadd.f32 0.0, %v1687
      %v1689 = vpop.f32.mrb[0].mxu0
      %v1690 = vpop.f32.mrb[0].mxu0
      %1691 = vdwg.mxu0
      %v1692 = vadd.f32 %v1631, %v1686
      %v1693 = vadd.f32 %v1632, %v1688
      %1694 = vrot.lane.b32.xlu0 %v1136, 111
      %v1695 = vpop.permute.xlu0 %1694
      %1696 = vrot.lane.b32.xlu0 %v1137, 111
      %v1697 = vpop.permute.xlu0 %1696
      %vm1698 = vcmask 908288
      %v1699 = vsel %vm1698, %v1695, %v1697
      %v1702 = vsel %vm1035, %v1697, 0
      %v1704 = vmul.bf16 %v1699, %v1317
      %v1705 = vmul.bf16 %v1702, %v1324
      %s1706 = scalar_lea.vmem %s3, 32
      %v1707 = vld [vmem:[%s1706] sm:$0xf]
      %v1709 = vsel %vm1201, %v1707, 0
      %v1712 = vsel %vm303, %v1704, 0
      %v1715 = vsel %vm303, %v1705, 0
      %1717 = vmatprep.subr.bf16.mxu0 %v1715
      %1718 = vmatpush1.bf16.msra.mxu0 %v1712
      %1719 = vmatprep.subr.bf16.mxu0 0
      %1720 = vmatpush1.bf16.msra.mxu0 0
      %1721 = vmatprep.subr.bf16.mxu0 0
      %1722 = vmatpush1.bf16.msra.mxu0 0
      %1723 = vmatprep.subr.bf16.mxu0 0
      %1724 = vmatpush1.bf16.msra.mxu0 0
      %1725 = vmatprep.subr.bf16.mxu0 0
      %1726 = vmatpush1.bf16.msra.mxu0 0
      %1727 = vmatprep.subr.bf16.mxu0 0
      %1728 = vmatpush1.bf16.msra.mxu0 0
      %1729 = vmatprep.subr.bf16.mxu0 0
      %1730 = vmatpush1.bf16.msra.mxu0 0
      %1731 = vmatprep.subr.bf16.mxu0 0
      %1732 = vmatpush1.bf16.msra.mxu0 0
      %1733 = vmatprep.subr.bf16.mxu0 0
      %1734 = vmatpush1.bf16.msra.mxu0 0
      %1735 = vmatprep.subr.bf16.mxu0 0
      %1736 = vmatpush1.bf16.msra.mxu0 0
      %1737 = vmatprep.subr.bf16.mxu0 0
      %1738 = vmatpush1.bf16.msra.mxu0 0
      %1739 = vmatprep.subr.bf16.mxu0 0
      %1740 = vmatpush1.bf16.msra.mxu0 0
      %1741 = vmatprep.subr.bf16.mxu0 0
      %1742 = vmatpush1.bf16.msra.mxu0 0
      %1743 = vmatprep.subr.bf16.mxu0 0
      %1744 = vmatpush1.bf16.msra.mxu0 0
      %1745 = vmatprep.subr.bf16.mxu0 0
      %1746 = vmatpush1.bf16.msra.mxu0 0
      %1747 = vmatprep.subr.bf16.mxu0 0
      %1748 = vmatpush1.bf16.msra.mxu0 0
      %1749 = vmatprep.mubr.bf16.mxu0 0
      %1750 = vmatmul.mubr.bf16.gmra.mrb[0].mxu0 %v1709
      %v1751 = vpop.f32.mrb[0].mxu0
      %v1752 = vadd.f32 0.0, %v1751
      %v1753 = vpop.f32.mrb[0].mxu0
      %v1754 = vadd.f32 0.0, %v1753
      %v1755 = vpop.f32.mrb[0].mxu0
      %v1756 = vpop.f32.mrb[0].mxu0
      %1757 = vdwg.mxu0
      %v1758 = vadd.f32 %v1692, %v1752
      %v1759 = vadd.f32 %v1693, %v1754
      %v1760 = vld [vmem:[%s4] sm:$0xff]
      %1762 = vset.pattern.permute.xlu0 0
      %1763 = vperm.xlu0 %1762, %v1760
      %v1764 = vpop.permute.xlu0 %1763
      %v1766 = vadd.f32 %v1758, %v1764
      %v1767 = vadd.f32 %v1759, %v1764
      %1768 = vst [vmem:[%s251] sm:$0xff] %v1766
      %1769 = vst [vmem:[%s251 + $0x8] sm:$0xff] %v1767
      %p1770 = scmp.lt.s32.totalorder %s17, 1
      %s1771 = scalar_select %p1770, %s17, 1
      %s1772 = smul.addr %s1771, 2
      %s1773 = smul.addr %s1772, 8
      %s1774 = scalar_lea.vmem %s6, %s1773
      // Predicated region
      $region45: #{block_forward.1} parent=43 // pred_check
        %p1775 = pneg %p166
      $region46: #{block_forward.1} parent=43 // pred_check_branch
        %1777 = sbr.rel (%p1775) target = $region48
      $region47: #{block_forward.1} parent=43 // pred_region
        _
      $region48: #{block_forward.1} parent=43 // pred_fallthru
        _
    $region44: #{block_forward.1} parent=5 // pred_fallthru
      _
    %p1778 = scmp.le.s32.totalorder 2, %s12
    // Predicated region
    $region49: #{block_forward.1} parent=5 // pred_check
      %p1779 = pneg %p1778
    $region50: #{block_forward.1} parent=5 // pred_check_branch
      %1781 = sbr.rel (%p1779) target = $region52
    $region51: #{block_forward.1} parent=5 // pred_region
      %s1782 = ssub.s32 %s12, 2
      // Predicated region
      $region53: #{block_forward.1} parent=51 // pred_check
        %p1783 = pneg %p172
      $region54: #{block_forward.1} parent=51 // pred_check_branch
        %1785 = sbr.rel (%p1783) target = $region56
      $region55: #{block_forward.1} parent=51 // pred_region
        %p1786 = scmp.lt.s32.totalorder %s18, 1
        %s1787 = scalar_select %p1786, %s18, 1
        %s1788 = smul.addr %s1787, 2
        %s1789 = smul.addr %s1788, 8
        %s1790 = scalar_lea.vmem %s6, %s1789
      $region56: #{block_forward.1} parent=51 // pred_fallthru
        _
    $region52: #{block_forward.1} parent=5 // pred_fallthru
      _
  $region6: #{block_forward.1} parent=0 // loop_footer
    %s16 = sadd.s32 1, %s12
  $region7: #{block_forward.1} parent=0 // loop_footer_branch
    %11 = sbr.rel target = $region3
  $region8: #{block_forward.1} parent=0 // loop_exit
    _

</llo_original>
